<compile_context>
chip_gen: v5e
topology: v5e:2x2
jax: 0.10.0
libtpu: 0.0.40
codegen_flags: <defaults>
</compile_context>

<pallas_src>
import functools

import jax
import jax.numpy as jnp
from jax.experimental import pallas as pl
from jax.experimental.pallas import tpu as pltpu


def _convlstm_kernel(p_ref, w_ref, c_ref, h_out_ref, c_out_ref, *, hidden):
    # p_ref : (K_pad, tn)        bf16 im2col patches (bias ones-row folded in)
    # w_ref : (4*hidden, K_pad)  bf16 conv weight (+ bias column, zero padded)
    # c_ref : (hidden, tn)       f32 current cell state, lane-dense
    # h_out_ref, c_out_ref : (hidden, tn)

    # Whole "same" convolution (incl. bias) as a single MXU matmul, f32 acc.
    cc = jnp.dot(w_ref[...], p_ref[...], preferred_element_type=jnp.float32)

    # Gate order matches torch.split along out_channels: i, f, o, g.
    # Sublane slices at multiples of `hidden` (>= 8) -> aligned, no relayout.
    sig = jax.nn.sigmoid(cc[:3 * hidden])            # one EUP pass for i|f|o
    i = sig[0 * hidden:1 * hidden]
    f = sig[1 * hidden:2 * hidden]
    o = sig[2 * hidden:3 * hidden]
    g = jnp.tanh(cc[3 * hidden:])

    c_cur = c_ref[...].astype(jnp.float32)           # lane-dense f32 state
    c_next = f * c_cur + i * g
    h_next = o * jnp.tanh(c_next)

    h_out_ref[...] = h_next.astype(h_out_ref.dtype)  # lane-dense stores
    c_out_ref[...] = c_next.astype(c_out_ref.dtype)


def _pick_n_tile(n):
    """Tile size along N = B*H*W.

    Prefer >= 2 lane-dense tiles (keeps both v7x TensorCores busy and bounds
    the per-step patches block for large images); fall back to the full extent
    when N cannot be split on a 128-lane boundary.
    """
    for t in (2048, 1024, 512, 256, 128):
        if t < n and n % t == 0:
            return t
    return n


def conv_lstm_cell(x_nchw, h_nchw, c_nchw, weight_oihw, bias, kernel_size):
    """ConvLSTMCell.forward.  Inputs/outputs are NCHW like the PyTorch module."""
    kh, kw = kernel_size
    # PyTorch's padding=kernel_size//2 only preserves spatial size for odd
    # kernels; this implementation assumes "same"-sized output.
    assert kh % 2 == 1 and kw % 2 == 1, "only odd kernel sizes are supported"

    B, c_in, H, W = x_nchw.shape
    hidden = h_nchw.shape[1]
    c_tot = c_in + hidden
    ph, pw = kh // 2, kw // 2
    M = H * W
    N = B * M
    K = c_tot * kh * kw
    K_pad = ((K + 1 + 127) // 128) * 128          # +1 for the folded bias row

    # ---- wrapper-side im2col, built directly in bf16 (halves HBM bytes of the
    #      dominant input).  Contraction axis ordering is (c, dh, dw) row-major
    #      (matches the OIHW weight flatten); (b, h, w) merges onto the N axis.
    comb = jnp.concatenate([x_nchw, h_nchw], axis=1).astype(jnp.bfloat16)
    comb_p = jnp.pad(comb, ((0, 0), (0, 0), (ph, ph), (pw, pw)))
    taps = [comb_p[:, :, dh:dh + H, dw:dw + W]
            for dh in range(kh) for dw in range(kw)]          # kh*kw x (B,c_tot,H,W)
    patches = jnp.stack(taps, axis=2)                          # (B, c_tot, T, H, W)
    patches = patches.transpose(1, 2, 0, 3, 4).reshape(K, N)   # (K, B*M)
    patches = jnp.concatenate(
        [patches, jnp.ones((1, N), jnp.bfloat16)], axis=0)     # bias ones-row
    patches = jnp.pad(patches, ((0, K_pad - (K + 1)), (0, 0)))  # (K_pad, N)

    # Weight: OIHW row-major flatten + bias column + zero pad, cast to bf16.
    w_flat = weight_oihw.reshape(4 * hidden, K)
    w_aug = jnp.concatenate([w_flat, bias.reshape(4 * hidden, 1)], axis=1)
    w_aug = jnp.pad(w_aug, ((0, 0), (0, K_pad - (K + 1)))).astype(jnp.bfloat16)

    # Cell state as (hidden, B*M): lane-dense, stays f32.
    c_flat = c_nchw.transpose(1, 0, 2, 3).reshape(hidden, N)

    tn = _pick_n_tile(N)
    kern = functools.partial(_convlstm_kernel, hidden=hidden)

    h_flat, c_next_flat = pl.pallas_call(
        kern,
        out_shape=(jax.ShapeDtypeStruct((hidden, N), x_nchw.dtype),
                   jax.ShapeDtypeStruct((hidden, N), x_nchw.dtype)),
        grid=(N // tn,),
        in_specs=[
            pl.BlockSpec((K_pad, tn), lambda n: (0, n)),
            pl.BlockSpec((4 * hidden, K_pad), lambda n: (0, 0)),  # resident weight
            pl.BlockSpec((hidden, tn), lambda n: (0, n)),
        ],
        out_specs=[
            pl.BlockSpec((hidden, tn), lambda n: (0, n)),
            pl.BlockSpec((hidden, tn), lambda n: (0, n)),
        ],
        input_output_aliases={2: 1},   # donate cell state buffer -> c_next
        compiler_params=pltpu.CompilerParams(
            dimension_semantics=("parallel",)),
    )(patches, w_aug, c_flat)

    # Free reshapes + a tiny (hidden, B) transpose back to NCHW.
    h_next = h_flat.reshape(hidden, B, H, W).transpose(1, 0, 2, 3)
    c_next = c_next_flat.reshape(hidden, B, H, W).transpose(1, 0, 2, 3)
    return h_next, c_next


def _reference_forward(x, h, c, weight_oihw, bias, kernel_size):
    """Pure-JAX f32 reference matching the PyTorch semantics (NCHW)."""
    kh, kw = kernel_size
    comb = jnp.concatenate([x, h], axis=1)
    cc = jax.lax.conv_general_dilated(
        comb, weight_oihw, window_strides=(1, 1),
        padding=((kh // 2, kh // 2), (kw // 2, kw // 2)),
        dimension_numbers=("NCHW", "OIHW", "NCHW"))
    cc = cc + bias[None, :, None, None]
    cc_i, cc_f, cc_o, cc_g = jnp.split(cc, 4, axis=1)
    i = jax.nn.sigmoid(cc_i)
    f = jax.nn.sigmoid(cc_f)
    o = jax.nn.sigmoid(cc_o)
    g = jnp.tanh(cc_g)
    c_next = f * c + i * g
    h_next = o * jnp.tanh(c_next)
    return h_next, c_next


if __name__ == "__main__":
    # Module config (deterministic, synthetic).
    input_dim, hidden_dim = 4, 32
    kernel_size = (3, 3)
    B, H, W = 2, 16, 16
    c_tot = input_dim + hidden_dim

    key = jax.random.PRNGKey(0)
    kx, kh_, kc, kw_, kb = jax.random.split(key, 5)

    x = jax.random.normal(kx, (B, input_dim, H, W), jnp.float32)
    h_cur = jax.random.normal(kh_, (B, hidden_dim, H, W), jnp.float32)
    c_cur = jax.random.normal(kc, (B, hidden_dim, H, W), jnp.float32)

    # Conv2d(in=c_tot, out=4*hidden, kernel=3x3, bias=True) params,
    # PyTorch-style uniform(-1/sqrt(fan_in), 1/sqrt(fan_in)) init.
    fan_in = c_tot * kernel_size[0] * kernel_size[1]
    bound = 1.0 / (fan_in ** 0.5)
    weight = jax.random.uniform(
        kw_, (4 * hidden_dim, c_tot, kernel_size[0], kernel_size[1]),
        jnp.float32, -bound, bound)
    bias = jax.random.uniform(kb, (4 * hidden_dim,), jnp.float32, -bound, bound)

    h_next, c_next = conv_lstm_cell(x, h_cur, c_cur, weight, bias, kernel_size)
    jax.block_until_ready((h_next, c_next))

    h_ref, c_ref = _reference_forward(x, h_cur, c_cur, weight, bias, kernel_size)
    assert h_next.shape == (B, hidden_dim, H, W)
    assert c_next.shape == (B, hidden_dim, H, W)
    # bf16 matmul operands with f32 accumulation vs. the all-f32 reference:
    # tolerance relaxed per the review (gate math and state stay f32).
    assert jnp.allclose(h_next, h_ref, atol=3e-2, rtol=3e-2)
    assert jnp.allclose(c_next, c_ref, atol=3e-2, rtol=3e-2)

    print("KERNEL_OK")
</pallas_src>

<mosaic_0001>
module attributes {stable_mosaic.version = 11 : i64} {
  func.func @_convlstm_kernel(%arg0: i32, %arg1: memref<384x256xbf16, #tpu.memory_space<vmem>>, %arg2: memref<128x384xbf16, #tpu.memory_space<vmem>>, %arg3: memref<32x256xf32, #tpu.memory_space<vmem>>, %arg4: memref<32x256xf32, #tpu.memory_space<vmem>>, %arg5: memref<32x256xf32, #tpu.memory_space<vmem>>) attributes {dimension_semantics = [#tpu.dimension_semantics<parallel>], iteration_bounds = array<i64: 2>, scalar_prefetch = 0 : i64, scratch_operands = 0 : i64, tpu.core_type = #tpu.core_type<tc>, window_params = [{transform_indices = @transform_0, window_bounds = array<i64: 384, 256>}, {pipeline_mode = #tpu.pipeline_mode<synchronous>, transform_indices = @transform_1, window_bounds = array<i64: 128, 384>}, {transform_indices = @transform_2, window_bounds = array<i64: 32, 256>}, {transform_indices = @transform_3, window_bounds = array<i64: 32, 256>}, {transform_indices = @transform_4, window_bounds = array<i64: 32, 256>}]} {
    %c0 = arith.constant 0 : index
    %c0_0 = arith.constant 0 : index
    %0 = vector.load %arg2[%c0, %c0_0] : memref<128x384xbf16, #tpu.memory_space<vmem>>, vector<128x384xbf16>
    %c0_1 = arith.constant 0 : index
    %c0_2 = arith.constant 0 : index
    %1 = vector.load %arg1[%c0_1, %c0_2] : memref<384x256xbf16, #tpu.memory_space<vmem>>, vector<384x256xbf16>
    %cst = arith.constant dense<0.000000e+00> : vector<128x256xf32>
    %2 = tpu.matmul %0, %1, %cst {dimension_numbers = #tpu.dot_dimension_numbers<[1], [0], [0], [1], [0, 0, 1, 1], [], []>} : vector<128x384xbf16>, vector<384x256xbf16>, vector<128x256xf32> -> vector<128x256xf32>
    %3 = vector.extract_strided_slice %2 {offsets = [0, 0], sizes = [96, 256], strides = [1, 1]} : vector<128x256xf32> to vector<96x256xf32>
    %4 = arith.negf %3 : vector<96x256xf32>
    %5 = math.exp %4 : vector<96x256xf32>
    %cst_3 = arith.constant 1.000000e+00 : f32
    %6 = vector.broadcast %cst_3 : f32 to vector<96x256xf32>
    %7 = arith.addf %6, %5 : vector<96x256xf32>
    %8 = arith.divf %6, %7 : vector<96x256xf32>
    %9 = vector.extract_strided_slice %8 {offsets = [0, 0], sizes = [32, 256], strides = [1, 1]} : vector<96x256xf32> to vector<32x256xf32>
    %10 = vector.extract_strided_slice %8 {offsets = [32, 0], sizes = [32, 256], strides = [1, 1]} : vector<96x256xf32> to vector<32x256xf32>
    %11 = vector.extract_strided_slice %8 {offsets = [64, 0], sizes = [32, 256], strides = [1, 1]} : vector<96x256xf32> to vector<32x256xf32>
    %12 = vector.extract_strided_slice %2 {offsets = [96, 0], sizes = [32, 256], strides = [1, 1]} : vector<128x256xf32> to vector<32x256xf32>
    %13 = math.tanh %12 : vector<32x256xf32>
    %c0_4 = arith.constant 0 : index
    %c0_5 = arith.constant 0 : index
    %14 = vector.load %arg3[%c0_4, %c0_5] : memref<32x256xf32, #tpu.memory_space<vmem>>, vector<32x256xf32>
    %15 = arith.mulf %10, %14 : vector<32x256xf32>
    %16 = arith.mulf %9, %13 : vector<32x256xf32>
    %17 = arith.addf %15, %16 : vector<32x256xf32>
    %18 = math.tanh %17 : vector<32x256xf32>
    %19 = arith.mulf %11, %18 : vector<32x256xf32>
    %c0_6 = arith.constant 0 : index
    %c0_7 = arith.constant 0 : index
    %20 = vector.load %arg4[%c0_6, %c0_7] : memref<32x256xf32, #tpu.memory_space<vmem>>, vector<32x256xf32>
    tpu.vector_store %arg4[%c0_6, %c0_7], %19 {strides = array<i32>} : memref<32x256xf32, #tpu.memory_space<vmem>>, vector<32x256xf32>,
    %c0_8 = arith.constant 0 : index
    %c0_9 = arith.constant 0 : index
    %21 = vector.load %arg5[%c0_8, %c0_9] : memref<32x256xf32, #tpu.memory_space<vmem>>, vector<32x256xf32>
    tpu.vector_store %arg5[%c0_8, %c0_9], %17 {strides = array<i32>} : memref<32x256xf32, #tpu.memory_space<vmem>>, vector<32x256xf32>,
    return
  }
  func.func @transform_0(%arg0: i32) -> (i32, i32) {
    %c0_i32 = arith.constant 0 : i32
    %c0_i32_0 = arith.constant 0 : i32
    return %c0_i32, %arg0 : i32, i32
  }
  func.func @transform_1(%arg0: i32) -> (i32, i32) {
    %c0_i32 = arith.constant 0 : i32
    %c0_i32_0 = arith.constant 0 : i32
    %c0_i32_1 = arith.constant 0 : i32
    return %c0_i32, %c0_i32_0 : i32, i32
  }
  func.func @transform_2(%arg0: i32) -> (i32, i32) {
    %c0_i32 = arith.constant 0 : i32
    %c0_i32_0 = arith.constant 0 : i32
    return %c0_i32, %arg0 : i32, i32
  }
  func.func @transform_3(%arg0: i32) -> (i32, i32) {
    %c0_i32 = arith.constant 0 : i32
    %c0_i32_0 = arith.constant 0 : i32
    return %c0_i32, %arg0 : i32, i32
  }
  func.func @transform_4(%arg0: i32) -> (i32, i32) {
    %c0_i32 = arith.constant 0 : i32
    %c0_i32_0 = arith.constant 0 : i32
    return %c0_i32, %arg0 : i32, i32
  }
}

</mosaic_0001>

<llo_original>
// kernel: tpu_custom_call.1
$region0: #{tpu_custom_call.1}
  #allocation0 [shape = 'u32[]', space=smem, size = 0x4, offset = 0x4, fixed_abs, tag = 'smem constant byte address 0x4 - core index']
  #allocation1 [shape = 'u32[72,128]{1,0:T(1,128)}', space=vmem, size = 0x9000, scoped, tag = 'internal scratch']
  %s0 = inlined_call_operand.hbm [shape: bf16[384,512], index: 0, kind: input, shape index: {}]
  %s1 = inlined_call_operand.vmem [shape: bf16[128,384], index: 1, kind: input, shape index: {}]
  %s2 = inlined_call_operand.hbm [shape: f32[32,512], index: 2, kind: input, shape index: {}, may-alias: {2,4}]
  %s3 = inlined_call_operand.hbm [shape: f32[32,512], index: 3, kind: output, shape index: {0}]
  %s4 = inlined_call_operand.hbm [shape: f32[32,512], index: 4, kind: output, shape index: {1}, may-alias: {2,4}]
  %5 = xla_tuple %s3, %s4
  %s6 = sld [smem:[#allocation0]]
  $region61: #{tpu_custom_call.1} parent=0
    _
  %s8 = ssub.s32 1, %s6
  %s9 = scalar_select 0, %s8, %s6
  $region1: #{tpu_custom_call.1} parent=0
    #allocation2 [shape = 'u8[393216]{0}', space=vmem, size = 0x60000, scoped, tag = 'input window, operand 0']
    #allocation3 [shape = 's32[2]{0}', space=sflag, size = 0x8, scoped, tag = 'scoped memory for tpu_custom_call.1']
    #allocation4 [shape = 's32[2]{0}', space=sflag, size = 0x8, scoped, tag = 'scoped memory for tpu_custom_call.1']
    #allocation5 [shape = 'u8[65536]{0}', space=vmem, size = 0x10000, scoped, tag = 'input window, operand 2']
    #allocation6 [shape = 's32[2]{0}', space=sflag, size = 0x8, scoped, tag = 'scoped memory for tpu_custom_call.1']
    #allocation7 [shape = 'u8[65536]{0}', space=vmem, size = 0x10000, scoped, tag = 'output window, operand 0']
    #allocation8 [shape = 'u8[65536]{0}', space=vmem, size = 0x10000, scoped, tag = 'output window, operand 1']
    #allocation9 [shape = 's32[2]{0}', space=sflag, size = 0x8, scoped, tag = 'scoped memory for tpu_custom_call.1']
    %10 = vsyncpa [#allocation3], 0
    %s11 = scalar_lea.sflag [#allocation3], 1
    %12 = vsyncpa %s11, 0
    %13 = vsyncpa [#allocation6], 0
    %s14 = scalar_lea.sflag [#allocation6], 1
    %15 = vsyncpa %s14, 0
    %16 = vsyncpa [#allocation4], 0
    %s17 = scalar_lea.sflag [#allocation4], 1
    %18 = vsyncpa %s17, 0
    %19 = vsyncpa [#allocation9], 0
    %s20 = scalar_lea.sflag [#allocation9], 1
    %21 = vsyncpa %s20, 0
    loop: start=0, step=1, limit=4
    $region2: #{tpu_custom_call.1} parent=1 // loop_pre_header
      _
    $region3: #{tpu_custom_call.1} parent=1 // loop_header
      %s23 = sphi 0, %s27
      %p24 = scmp.ge.s32.totalorder %s23, 4
      %s33 = sphi 0, %s35
      %s36 = sphi 0, %s33
      %s37 = sphi 0, %s36
      %s53 = sphi 0, %s37
      %s57 = sphi 0, %s57
      %s59 = sphi 0, %s57
      %s60 = sphi 0, %s59
      %s74 = sphi 0, %s60
      %s80 = sphi 0, %s82
      %s83 = sphi 0, %s80
      %s84 = sphi 0, %s83
      %s100 = sphi 0, %s84
      %s106 = sphi 0, %s108
      %s109 = sphi 0, %s106
      %s110 = sphi 0, %s109
      %s126 = sphi 0, %s110
      %s132 = sphi 0, %s134
      %s135 = sphi 0, %s132
      %s136 = sphi 0, %s135
      %s152 = sphi 0, %s136
    $region4: #{tpu_custom_call.1} parent=1 // loop_header_branch
      %26 = sbr.rel (%p24) target = $region8
    $region5: #{tpu_custom_call.1} parent=1 // loop_body
      %s28 = ssub.s32 %s23, 1
      %s29 = ssub.s32 %s23, 2
      %s30 = sadd.s32 %s23, 1
      %s31 = ssub.s32 %s23, %s30
      %p32 = scmp.eq.s32.totalorder %s31, 0
      %s34 = sadd.s32 %s33, 1
      %s35 = scalar_select %p32, %s33, %s34
      %p38 = pneg %p32
      %p39 = scmp.eq.s32.totalorder %s23, 1
      %p40 = por %p38, %p39
      %p41 = scmp.ne.s32.totalorder %s33, %s36
      %p42 = scmp.eq.s32.totalorder %s23, 0
      %p43 = por %p41, %p42
      %p44 = scmp.ne.s32.totalorder %s33, %s36
      %p45 = scmp.eq.s32.totalorder %s28, 1
      %p46 = por %p44, %p45
      %p47 = scmp.ne.s32.totalorder %s36, %s37
      %p48 = scmp.eq.s32.totalorder %s28, 0
      %p49 = por %p47, %p48
      %p50 = scmp.ne.s32.totalorder %s36, %s37
      %p51 = scmp.eq.s32.totalorder %s29, 1
      %p52 = por %p50, %p51
      %p54 = scmp.ne.s32.totalorder %s37, %s53
      %p55 = scmp.eq.s32.totalorder %s29, 0
      %p56 = por %p54, %p55
      %s58 = sadd.s32 %s57, 1
      %p61 = scmp.eq.s32.totalorder %s23, 1
      %p62 = scmp.ne.s32.totalorder %s57, %s59
      %p63 = scmp.eq.s32.totalorder %s23, 0
      %p64 = por %p62, %p63
      %p65 = scmp.ne.s32.totalorder %s57, %s59
      %p66 = scmp.eq.s32.totalorder %s28, 1
      %p67 = por %p65, %p66
      %p68 = scmp.ne.s32.totalorder %s59, %s60
      %p69 = scmp.eq.s32.totalorder %s28, 0
      %p70 = por %p68, %p69
      %p71 = scmp.ne.s32.totalorder %s59, %s60
      %p72 = scmp.eq.s32.totalorder %s29, 1
      %p73 = por %p71, %p72
      %p75 = scmp.ne.s32.totalorder %s60, %s74
      %p76 = scmp.eq.s32.totalorder %s29, 0
      %p77 = por %p75, %p76
      %s78 = ssub.s32 %s23, %s30
      %p79 = scmp.eq.s32.totalorder %s78, 0
      %s81 = sadd.s32 %s80, 1
      %s82 = scalar_select %p79, %s80, %s81
      %p85 = pneg %p79
      %p86 = scmp.eq.s32.totalorder %s23, 1
      %p87 = por %p85, %p86
      %p88 = scmp.ne.s32.totalorder %s80, %s83
      %p89 = scmp.eq.s32.totalorder %s23, 0
      %p90 = por %p88, %p89
      %p91 = scmp.ne.s32.totalorder %s80, %s83
      %p92 = scmp.eq.s32.totalorder %s28, 1
      %p93 = por %p91, %p92
      %p94 = scmp.ne.s32.totalorder %s83, %s84
      %p95 = scmp.eq.s32.totalorder %s28, 0
      %p96 = por %p94, %p95
      %p97 = scmp.ne.s32.totalorder %s83, %s84
      %p98 = scmp.eq.s32.totalorder %s29, 1
      %p99 = por %p97, %p98
      %p101 = scmp.ne.s32.totalorder %s84, %s100
      %p102 = scmp.eq.s32.totalorder %s29, 0
      %p103 = por %p101, %p102
      %s104 = ssub.s32 %s23, %s30
      %p105 = scmp.eq.s32.totalorder %s104, 0
      %s107 = sadd.s32 %s106, 1
      %s108 = scalar_select %p105, %s106, %s107
      %p111 = pneg %p105
      %p112 = scmp.eq.s32.totalorder %s23, 1
      %p113 = por %p111, %p112
      %p114 = scmp.ne.s32.totalorder %s106, %s109
      %p115 = scmp.eq.s32.totalorder %s23, 0
      %p116 = por %p114, %p115
      %p117 = scmp.ne.s32.totalorder %s106, %s109
      %p118 = scmp.eq.s32.totalorder %s28, 1
      %p119 = por %p117, %p118
      %p120 = scmp.ne.s32.totalorder %s109, %s110
      %p121 = scmp.eq.s32.totalorder %s28, 0
      %p122 = por %p120, %p121
      %p123 = scmp.ne.s32.totalorder %s109, %s110
      %p124 = scmp.eq.s32.totalorder %s29, 1
      %p125 = por %p123, %p124
      %p127 = scmp.ne.s32.totalorder %s110, %s126
      %p128 = scmp.eq.s32.totalorder %s29, 0
      %p129 = por %p127, %p128
      %s130 = ssub.s32 %s23, %s30
      %p131 = scmp.eq.s32.totalorder %s130, 0
      %s133 = sadd.s32 %s132, 1
      %s134 = scalar_select %p131, %s132, %s133
      %p137 = pneg %p131
      %p138 = scmp.eq.s32.totalorder %s23, 1
      %p139 = por %p137, %p138
      %p140 = scmp.ne.s32.totalorder %s132, %s135
      %p141 = scmp.eq.s32.totalorder %s23, 0
      %p142 = por %p140, %p141
      %p143 = scmp.ne.s32.totalorder %s132, %s135
      %p144 = scmp.eq.s32.totalorder %s28, 1
      %p145 = por %p143, %p144
      %p146 = scmp.ne.s32.totalorder %s135, %s136
      %p147 = scmp.eq.s32.totalorder %s28, 0
      %p148 = por %p146, %p147
      %p149 = scmp.ne.s32.totalorder %s135, %s136
      %p150 = scmp.eq.s32.totalorder %s29, 1
      %p151 = por %p149, %p150
      %p153 = scmp.ne.s32.totalorder %s136, %s152
      %p154 = scmp.eq.s32.totalorder %s29, 0
      %p155 = por %p153, %p154
      %p156 = scmp.le.s32.totalorder 1, %s23
      %p157 = scmp.lt.s32.totalorder %s23, 3
      %p158 = pnand %p156, %p157
      %p159 = pneg %p158
      // Predicated region
      $region9: #{tpu_custom_call.1} parent=5 // pred_check
        _
      $region10: #{tpu_custom_call.1} parent=5 // pred_check_branch
        %161 = sbr.rel (%p158) target = $region12
      $region11: #{tpu_custom_call.1} parent=5 // pred_region
        %s162 = ssub.s32 %s23, 1
        // Predicated region
        $region13: #{tpu_custom_call.1} parent=11 // pred_check
          %p163 = pneg %p70
        $region14: #{tpu_custom_call.1} parent=11 // pred_check_branch
          %165 = sbr.rel (%p163) target = $region16
        $region15: #{tpu_custom_call.1} parent=11 // pred_region
          _
        $region16: #{tpu_custom_call.1} parent=11 // pred_fallthru
          _
      $region12: #{tpu_custom_call.1} parent=5 // pred_fallthru
        _
      %p166 = scmp.lt.s32.totalorder %s23, 2
      // Predicated region
      $region17: #{tpu_custom_call.1} parent=5 // pred_check
        %p167 = pneg %p166
      $region18: #{tpu_custom_call.1} parent=5 // pred_check_branch
        %169 = sbr.rel (%p167) target = $region20
      $region19: #{tpu_custom_call.1} parent=5 // pred_region
        // Predicated region
        $region21: #{tpu_custom_call.1} parent=19 // pred_check
          %p170 = pneg %p43
        $region22: #{tpu_custom_call.1} parent=19 // pred_check_branch
          %172 = sbr.rel (%p170) target = $region24
        $region23: #{tpu_custom_call.1} parent=19 // pred_region
          %s173 = sand.u32 %s33, 1
          %s174 = scalar_lea.sflag [#allocation3], %s173
          %s175 = sand.u32 %s33, 1
          %s176 = smul.addr %s175, 384
          %s177 = scalar_lea.vmem [#allocation2], %s176
          %s178 = smul.u32 2, %s23
          %180 = vsyncadd %s174, 0
          %s181 = smul.addr %s178, 4
          %s182 = scalar_lea.hbm %s0, %s181
          %s183 = sshll.u32 %s182, 4
          %s184 = int_to_ptr.hbm [resolvable:$true] %s183
          %s185 = sshll.u32 %s177, 4
          %s186 = int_to_ptr.vmem [resolvable:$true] %s185
          %191 = dma.hbm_to_vmem [thread:$0]  %s184, 6144, %s186, %s174, 256, 128, 8
        $region24: #{tpu_custom_call.1} parent=19 // pred_fallthru
          _
        // Predicated region
        $region25: #{tpu_custom_call.1} parent=19 // pred_check
          %p192 = pneg %p90
        $region26: #{tpu_custom_call.1} parent=19 // pred_check_branch
          %194 = sbr.rel (%p192) target = $region28
        $region27: #{tpu_custom_call.1} parent=19 // pred_region
          %s195 = sand.u32 %s80, 1
          %s196 = scalar_lea.sflag [#allocation6], %s195
          %s197 = sand.u32 %s80, 1
          %s198 = smul.addr %s197, 64
          %s199 = scalar_lea.vmem [#allocation5], %s198
          %s200 = smul.u32 2, %s23
          %202 = vsyncadd %s196, 0
          %s203 = smul.addr %s200, 8
          %s204 = scalar_lea.hbm %s2, %s203
          %s205 = sshll.u32 %s204, 4
          %s206 = int_to_ptr.hbm [resolvable:$true] %s205
          %s207 = sshll.u32 %s199, 4
          %s208 = int_to_ptr.vmem [resolvable:$true] %s207
          %213 = dma.hbm_to_vmem [thread:$0]  %s206, 1024, %s208, %s196, 512, 256, 16
        $region28: #{tpu_custom_call.1} parent=19 // pred_fallthru
          _
      $region20: #{tpu_custom_call.1} parent=5 // pred_fallthru
        _
      %p214 = scmp.le.s32.totalorder 1, %s23
      %p215 = scmp.lt.s32.totalorder %s23, 3
      %p216 = pnand %p214, %p215
      %p217 = pneg %p216
      // Predicated region
      $region29: #{tpu_custom_call.1} parent=5 // pred_check
        _
      $region30: #{tpu_custom_call.1} parent=5 // pred_check_branch
        %219 = sbr.rel (%p216) target = $region32
      $region31: #{tpu_custom_call.1} parent=5 // pred_region
        %s220 = ssub.s32 %s23, 1
        %s221 = sand.u32 %s36, 1
        %s222 = scalar_lea.sflag [#allocation3], %s221
        %s223 = sand.u32 %s36, 1
        %s224 = smul.addr %s223, 384
        %s225 = scalar_lea.vmem [#allocation2], %s224
        // Predicated region
        $region33: #{tpu_custom_call.1} parent=31 // pred_check
          %p226 = pneg %p49
        $region34: #{tpu_custom_call.1} parent=31 // pred_check_branch
          %228 = sbr.rel (%p226) target = $region36
        $region35: #{tpu_custom_call.1} parent=31 // pred_region
          %230 = dma.done %s222, 6144
        $region36: #{tpu_custom_call.1} parent=31 // pred_fallthru
          _
        %s231 = sand.u32 %s83, 1
        %s232 = scalar_lea.sflag [#allocation6], %s231
        %s233 = sand.u32 %s83, 1
        %s234 = smul.addr %s233, 64
        %s235 = scalar_lea.vmem [#allocation5], %s234
        // Predicated region
        $region37: #{tpu_custom_call.1} parent=31 // pred_check
          %p236 = pneg %p96
        $region38: #{tpu_custom_call.1} parent=31 // pred_check_branch
          %238 = sbr.rel (%p236) target = $region40
        $region39: #{tpu_custom_call.1} parent=31 // pred_region
          %240 = dma.done %s232, 1024
        $region40: #{tpu_custom_call.1} parent=31 // pred_fallthru
          _
        %s241 = sand.u32 %s36, 1
        %s242 = scalar_lea.sflag [#allocation3], %s241
        %s243 = sand.u32 %s36, 1
        %s244 = smul.addr %s243, 384
        %s245 = scalar_lea.vmem [#allocation2], %s244
        %p246 = pneg %p49
        %p247 = pneg %p46
        %p248 = pneg %p70
        %p249 = pneg %p67
        %s250 = sand.u32 %s83, 1
        %s251 = scalar_lea.sflag [#allocation6], %s250
        %s252 = sand.u32 %s83, 1
        %s253 = smul.addr %s252, 64
        %s254 = scalar_lea.vmem [#allocation5], %s253
        %p255 = pneg %p96
        %p256 = pneg %p93
        %p257 = pneg %p122
        %p258 = pneg %p119
        %s259 = sand.u32 %s109, 1
        %s260 = scalar_lea.sflag [#allocation4], %s259
        %s261 = sand.u32 %s109, 1
        %s262 = smul.addr %s261, 64
        %s263 = scalar_lea.vmem [#allocation7], %s262
        %p264 = pneg %p148
        %p265 = pneg %p145
        %s266 = sand.u32 %s135, 1
        %s267 = scalar_lea.sflag [#allocation9], %s266
        %s268 = sand.u32 %s135, 1
        %s269 = smul.addr %s268, 64
        %s270 = scalar_lea.vmem [#allocation8], %s269
        %s271 = smul.u32 2, %s28
        %s272 = smul.u32 2, %s28
        %s273 = smul.u32 2, %s28
        %s274 = smul.u32 2, %s28
        %v275 = vld [vmem:[%s1] sm:$0xff]
        %v276 = vld [vmem:[%s1 + $0x8] sm:$0xf]
        %v277 = vld [vmem:[%s1 + $0xc] sm:$0xff]
        %v278 = vld [vmem:[%s1 + $0x14] sm:$0xf]
        %v279 = vld [vmem:[%s1 + $0x18] sm:$0xff]
        %v280 = vld [vmem:[%s1 + $0x20] sm:$0xf]
        %v281 = vld [vmem:[%s1 + $0x24] sm:$0xff]
        %v282 = vld [vmem:[%s1 + $0x2c] sm:$0xf]
        %v283 = vld [vmem:[%s1 + $0x30] sm:$0xff]
        %v284 = vld [vmem:[%s1 + $0x38] sm:$0xf]
        %v285 = vld [vmem:[%s1 + $0x3c] sm:$0xff]
        %v286 = vld [vmem:[%s1 + $0x44] sm:$0xf]
        %v287 = vld [vmem:[%s1 + $0x48] sm:$0xff]
        %v288 = vld [vmem:[%s1 + $0x50] sm:$0xf]
        %v289 = vld [vmem:[%s1 + $0x54] sm:$0xff]
        %v290 = vld [vmem:[%s1 + $0x5c] sm:$0xf]
        %v291 = vld [vmem:[%s1 + $0x60] sm:$0xff]
        %v292 = vld [vmem:[%s1 + $0x68] sm:$0xf]
        %v293 = vld [vmem:[%s1 + $0x6c] sm:$0xff]
        %v294 = vld [vmem:[%s1 + $0x74] sm:$0xf]
        %v295 = vld [vmem:[%s1 + $0x78] sm:$0xff]
        %v296 = vld [vmem:[%s1 + $0x80] sm:$0xf]
        %v297 = vld [vmem:[%s1 + $0x84] sm:$0xff]
        %v298 = vld [vmem:[%s1 + $0x8c] sm:$0xf]
        %v299 = vld [vmem:[%s1 + $0x90] sm:$0xff]
        %v300 = vld [vmem:[%s1 + $0x98] sm:$0xf]
        %v301 = vld [vmem:[%s1 + $0x9c] sm:$0xff]
        %v302 = vld [vmem:[%s1 + $0xa4] sm:$0xf]
        %v303 = vld [vmem:[%s1 + $0xa8] sm:$0xff]
        %v304 = vld [vmem:[%s1 + $0xb0] sm:$0xf]
        %v305 = vld [vmem:[%s1 + $0xb4] sm:$0xff]
        %v306 = vld [vmem:[%s1 + $0xbc] sm:$0xf]
        %v307 = vld [vmem:[%s225] sm:$0xff]
        %v308 = vld [vmem:[%s225 + $0x8] sm:$0xff]
        %v309 = vld [vmem:[%s225 + $0x10] sm:$0xff]
        %v310 = vld [vmem:[%s225 + $0x18] sm:$0xff]
        %v311 = vld [vmem:[%s225 + $0x20] sm:$0xff]
        %v312 = vld [vmem:[%s225 + $0x28] sm:$0xff]
        %v313 = vld [vmem:[%s225 + $0x30] sm:$0xff]
        %v314 = vld [vmem:[%s225 + $0x38] sm:$0xff]
        %v315 = vld [vmem:[%s225 + $0x40] sm:$0xff]
        %v316 = vld [vmem:[%s225 + $0x48] sm:$0xff]
        %v317 = vld [vmem:[%s225 + $0x50] sm:$0xff]
        %v318 = vld [vmem:[%s225 + $0x58] sm:$0xff]
        %v319 = vld [vmem:[%s225 + $0x60] sm:$0xff]
        %v320 = vld [vmem:[%s225 + $0x68] sm:$0xff]
        %v321 = vld [vmem:[%s225 + $0x70] sm:$0xff]
        %v322 = vld [vmem:[%s225 + $0x78] sm:$0xff]
        %v323 = vld [vmem:[%s225 + $0x80] sm:$0xff]
        %v324 = vld [vmem:[%s225 + $0x88] sm:$0xff]
        %v325 = vld [vmem:[%s225 + $0x90] sm:$0xff]
        %v326 = vld [vmem:[%s225 + $0x98] sm:$0xff]
        %v327 = vld [vmem:[%s225 + $0xa0] sm:$0xff]
        %v328 = vld [vmem:[%s225 + $0xa8] sm:$0xff]
        %v329 = vld [vmem:[%s225 + $0xb0] sm:$0xff]
        %v330 = vld [vmem:[%s225 + $0xb8] sm:$0xff]
        %v331 = vld [vmem:[%s225 + $0xc0] sm:$0xff]
        %v332 = vld [vmem:[%s225 + $0xc8] sm:$0xff]
        %v333 = vld [vmem:[%s225 + $0xd0] sm:$0xff]
        %v334 = vld [vmem:[%s225 + $0xd8] sm:$0xff]
        %v335 = vld [vmem:[%s225 + $0xe0] sm:$0xff]
        %v336 = vld [vmem:[%s225 + $0xe8] sm:$0xff]
        %v337 = vld [vmem:[%s225 + $0xf0] sm:$0xff]
        %v338 = vld [vmem:[%s225 + $0xf8] sm:$0xff]
        %v339 = vld [vmem:[%s225 + $0x100] sm:$0xff]
        %v340 = vld [vmem:[%s225 + $0x108] sm:$0xff]
        %v341 = vld [vmem:[%s225 + $0x110] sm:$0xff]
        %v342 = vld [vmem:[%s225 + $0x118] sm:$0xff]
        %v343 = vld [vmem:[%s225 + $0x120] sm:$0xff]
        %v344 = vld [vmem:[%s225 + $0x128] sm:$0xff]
        %v345 = vld [vmem:[%s225 + $0x130] sm:$0xff]
        %v346 = vld [vmem:[%s225 + $0x138] sm:$0xff]
        %v347 = vld [vmem:[%s225 + $0x140] sm:$0xff]
        %v348 = vld [vmem:[%s225 + $0x148] sm:$0xff]
        %v349 = vld [vmem:[%s225 + $0x150] sm:$0xff]
        %v350 = vld [vmem:[%s225 + $0x158] sm:$0xff]
        %v351 = vld [vmem:[%s225 + $0x160] sm:$0xff]
        %v352 = vld [vmem:[%s225 + $0x168] sm:$0xff]
        %v353 = vld [vmem:[%s225 + $0x170] sm:$0xff]
        %v354 = vld [vmem:[%s225 + $0x178] sm:$0xff]
        %v387 = vunpack.c.l.b16 %v275
        %v388 = vunpack.c.h.b16 %v275
        %v389 = vunpack.c.l.b16 %v276
        %v390 = vunpack.c.l.b16 %v277
        %v391 = vunpack.c.h.b16 %v277
        %v392 = vunpack.c.l.b16 %v278
        %v393 = vunpack.c.l.b16 %v279
        %v394 = vunpack.c.h.b16 %v279
        %v395 = vunpack.c.l.b16 %v280
        %v396 = vunpack.c.l.b16 %v281
        %v397 = vunpack.c.h.b16 %v281
        %v398 = vunpack.c.l.b16 %v282
        %v399 = vunpack.c.l.b16 %v283
        %v400 = vunpack.c.h.b16 %v283
        %v401 = vunpack.c.l.b16 %v284
        %v402 = vunpack.c.l.b16 %v285
        %v403 = vunpack.c.h.b16 %v285
        %v404 = vunpack.c.l.b16 %v286
        %v405 = vunpack.c.l.b16 %v287
        %v406 = vunpack.c.h.b16 %v287
        %v407 = vunpack.c.l.b16 %v288
        %v408 = vunpack.c.l.b16 %v289
        %v409 = vunpack.c.h.b16 %v289
        %v410 = vunpack.c.l.b16 %v290
        %v411 = vunpack.c.l.b16 %v291
        %v412 = vunpack.c.h.b16 %v291
        %v413 = vunpack.c.l.b16 %v292
        %v414 = vunpack.c.l.b16 %v293
        %v415 = vunpack.c.h.b16 %v293
        %v416 = vunpack.c.l.b16 %v294
        %v417 = vunpack.c.l.b16 %v295
        %v418 = vunpack.c.h.b16 %v295
        %v419 = vunpack.c.l.b16 %v296
        %v420 = vunpack.c.l.b16 %v297
        %v421 = vunpack.c.h.b16 %v297
        %v422 = vunpack.c.l.b16 %v298
        %v423 = vunpack.c.l.b16 %v299
        %v424 = vunpack.c.h.b16 %v299
        %v425 = vunpack.c.l.b16 %v300
        %v426 = vunpack.c.l.b16 %v301
        %v427 = vunpack.c.h.b16 %v301
        %v428 = vunpack.c.l.b16 %v302
        %v429 = vunpack.c.l.b16 %v303
        %v430 = vunpack.c.h.b16 %v303
        %v431 = vunpack.c.l.b16 %v304
        %v432 = vunpack.c.l.b16 %v305
        %v433 = vunpack.c.h.b16 %v305
        %v434 = vunpack.c.l.b16 %v306
        %v435 = vpack.c.b16 %v390, %v387
        %v436 = vpack.c.b16 %v391, %v388
        %v437 = vpack.c.b16 %v392, %v389
        %v438 = vpack.c.b16 %v396, %v393
        %v439 = vpack.c.b16 %v397, %v394
        %v440 = vpack.c.b16 %v398, %v395
        %v441 = vpack.c.b16 %v402, %v399
        %v442 = vpack.c.b16 %v403, %v400
        %v443 = vpack.c.b16 %v404, %v401
        %v444 = vpack.c.b16 %v408, %v405
        %v445 = vpack.c.b16 %v409, %v406
        %v446 = vpack.c.b16 %v410, %v407
        %v447 = vpack.c.b16 %v414, %v411
        %v448 = vpack.c.b16 %v415, %v412
        %v449 = vpack.c.b16 %v416, %v413
        %v450 = vpack.c.b16 %v420, %v417
        %v451 = vpack.c.b16 %v421, %v418
        %v452 = vpack.c.b16 %v422, %v419
        %v453 = vpack.c.b16 %v426, %v423
        %v454 = vpack.c.b16 %v427, %v424
        %v455 = vpack.c.b16 %v428, %v425
        %v456 = vpack.c.b16 %v432, %v429
        %v457 = vpack.c.b16 %v433, %v430
        %v458 = vpack.c.b16 %v434, %v431
        %v531 = vunpack.c.l.b16 %v307
        %v532 = vunpack.c.h.b16 %v307
        %v533 = vunpack.c.l.b16 %v308
        %v534 = vunpack.c.h.b16 %v308
        %v535 = vunpack.c.l.b16 %v309
        %v536 = vunpack.c.h.b16 %v309
        %v537 = vunpack.c.l.b16 %v310
        %v538 = vunpack.c.h.b16 %v310
        %v539 = vunpack.c.l.b16 %v311
        %v540 = vunpack.c.h.b16 %v311
        %v541 = vunpack.c.l.b16 %v312
        %v542 = vunpack.c.h.b16 %v312
        %v543 = vunpack.c.l.b16 %v313
        %v544 = vunpack.c.h.b16 %v313
        %v545 = vunpack.c.l.b16 %v314
        %v546 = vunpack.c.h.b16 %v314
        %v547 = vunpack.c.l.b16 %v315
        %v548 = vunpack.c.h.b16 %v315
        %v549 = vunpack.c.l.b16 %v316
        %v550 = vunpack.c.h.b16 %v316
        %v551 = vunpack.c.l.b16 %v317
        %v552 = vunpack.c.h.b16 %v317
        %v553 = vunpack.c.l.b16 %v318
        %v554 = vunpack.c.h.b16 %v318
        %v555 = vunpack.c.l.b16 %v319
        %v556 = vunpack.c.h.b16 %v319
        %v557 = vunpack.c.l.b16 %v320
        %v558 = vunpack.c.h.b16 %v320
        %v559 = vunpack.c.l.b16 %v321
        %v560 = vunpack.c.h.b16 %v321
        %v561 = vunpack.c.l.b16 %v322
        %v562 = vunpack.c.h.b16 %v322
        %v563 = vunpack.c.l.b16 %v323
        %v564 = vunpack.c.h.b16 %v323
        %v565 = vunpack.c.l.b16 %v324
        %v566 = vunpack.c.h.b16 %v324
        %v567 = vunpack.c.l.b16 %v325
        %v568 = vunpack.c.h.b16 %v325
        %v569 = vunpack.c.l.b16 %v326
        %v570 = vunpack.c.h.b16 %v326
        %v571 = vunpack.c.l.b16 %v327
        %v572 = vunpack.c.h.b16 %v327
        %v573 = vunpack.c.l.b16 %v328
        %v574 = vunpack.c.h.b16 %v328
        %v575 = vunpack.c.l.b16 %v329
        %v576 = vunpack.c.h.b16 %v329
        %v577 = vunpack.c.l.b16 %v330
        %v578 = vunpack.c.h.b16 %v330
        %v579 = vunpack.c.l.b16 %v331
        %v580 = vunpack.c.h.b16 %v331
        %v581 = vunpack.c.l.b16 %v332
        %v582 = vunpack.c.h.b16 %v332
        %v583 = vunpack.c.l.b16 %v333
        %v584 = vunpack.c.h.b16 %v333
        %v585 = vunpack.c.l.b16 %v334
        %v586 = vunpack.c.h.b16 %v334
        %v587 = vunpack.c.l.b16 %v335
        %v588 = vunpack.c.h.b16 %v335
        %v589 = vunpack.c.l.b16 %v336
        %v590 = vunpack.c.h.b16 %v336
        %v591 = vunpack.c.l.b16 %v337
        %v592 = vunpack.c.h.b16 %v337
        %v593 = vunpack.c.l.b16 %v338
        %v594 = vunpack.c.h.b16 %v338
        %v595 = vunpack.c.l.b16 %v339
        %v596 = vunpack.c.h.b16 %v339
        %v597 = vunpack.c.l.b16 %v340
        %v598 = vunpack.c.h.b16 %v340
        %v599 = vunpack.c.l.b16 %v341
        %v600 = vunpack.c.h.b16 %v341
        %v601 = vunpack.c.l.b16 %v342
        %v602 = vunpack.c.h.b16 %v342
        %v603 = vunpack.c.l.b16 %v343
        %v604 = vunpack.c.h.b16 %v343
        %v605 = vunpack.c.l.b16 %v344
        %v606 = vunpack.c.h.b16 %v344
        %v607 = vunpack.c.l.b16 %v345
        %v608 = vunpack.c.h.b16 %v345
        %v609 = vunpack.c.l.b16 %v346
        %v610 = vunpack.c.h.b16 %v346
        %v611 = vunpack.c.l.b16 %v347
        %v612 = vunpack.c.h.b16 %v347
        %v613 = vunpack.c.l.b16 %v348
        %v614 = vunpack.c.h.b16 %v348
        %v615 = vunpack.c.l.b16 %v349
        %v616 = vunpack.c.h.b16 %v349
        %v617 = vunpack.c.l.b16 %v350
        %v618 = vunpack.c.h.b16 %v350
        %v619 = vunpack.c.l.b16 %v351
        %v620 = vunpack.c.h.b16 %v351
        %v621 = vunpack.c.l.b16 %v352
        %v622 = vunpack.c.h.b16 %v352
        %v623 = vunpack.c.l.b16 %v353
        %v624 = vunpack.c.h.b16 %v353
        %v625 = vunpack.c.l.b16 %v354
        %v626 = vunpack.c.h.b16 %v354
        %v627 = vpack.c.b16 %v533, %v531
        %v628 = vpack.c.b16 %v534, %v532
        %v629 = vpack.c.b16 %v537, %v535
        %v630 = vpack.c.b16 %v538, %v536
        %v631 = vpack.c.b16 %v541, %v539
        %v632 = vpack.c.b16 %v542, %v540
        %v633 = vpack.c.b16 %v545, %v543
        %v634 = vpack.c.b16 %v546, %v544
        %v635 = vpack.c.b16 %v549, %v547
        %v636 = vpack.c.b16 %v550, %v548
        %v637 = vpack.c.b16 %v553, %v551
        %v638 = vpack.c.b16 %v554, %v552
        %v639 = vpack.c.b16 %v557, %v555
        %v640 = vpack.c.b16 %v558, %v556
        %v641 = vpack.c.b16 %v561, %v559
        %v642 = vpack.c.b16 %v562, %v560
        %v643 = vpack.c.b16 %v565, %v563
        %v644 = vpack.c.b16 %v566, %v564
        %v645 = vpack.c.b16 %v569, %v567
        %v646 = vpack.c.b16 %v570, %v568
        %v647 = vpack.c.b16 %v573, %v571
        %v648 = vpack.c.b16 %v574, %v572
        %v649 = vpack.c.b16 %v577, %v575
        %v650 = vpack.c.b16 %v578, %v576
        %v651 = vpack.c.b16 %v581, %v579
        %v652 = vpack.c.b16 %v582, %v580
        %v653 = vpack.c.b16 %v585, %v583
        %v654 = vpack.c.b16 %v586, %v584
        %v655 = vpack.c.b16 %v589, %v587
        %v656 = vpack.c.b16 %v590, %v588
        %v657 = vpack.c.b16 %v593, %v591
        %v658 = vpack.c.b16 %v594, %v592
        %v659 = vpack.c.b16 %v597, %v595
        %v660 = vpack.c.b16 %v598, %v596
        %v661 = vpack.c.b16 %v601, %v599
        %v662 = vpack.c.b16 %v602, %v600
        %v663 = vpack.c.b16 %v605, %v603
        %v664 = vpack.c.b16 %v606, %v604
        %v665 = vpack.c.b16 %v609, %v607
        %v666 = vpack.c.b16 %v610, %v608
        %v667 = vpack.c.b16 %v613, %v611
        %v668 = vpack.c.b16 %v614, %v612
        %v669 = vpack.c.b16 %v617, %v615
        %v670 = vpack.c.b16 %v618, %v616
        %v671 = vpack.c.b16 %v621, %v619
        %v672 = vpack.c.b16 %v622, %v620
        %v673 = vpack.c.b16 %v625, %v623
        %v674 = vpack.c.b16 %v626, %v624
        %723 = vmatpush.bf16.msra.mxu0 %v641
        %724 = vmatpush.bf16.msra.mxu0 %v639
        %725 = vmatpush.bf16.msra.mxu0 %v637
        %726 = vmatpush.bf16.msra.mxu0 %v635
        %727 = vmatpush.bf16.msra.mxu0 %v633
        %728 = vmatpush.bf16.msra.mxu0 %v631
        %729 = vmatpush.bf16.msra.mxu0 %v629
        %730 = vmatpush.bf16.msra.mxu0 %v627
        %731 = vmatmul.bf16.gmra.mxu0 %v435
        %v732 = vpop.f32.mrf.mxu0
        %v733 = vadd.f32 0.0, %v732
        %v734 = vpop.f32.mrf.mxu0
        %v735 = vadd.f32 0.0, %v734
        %736 = vmatmul.bf16.gmra.mxu0 %v438
        %v737 = vpop.f32.mrf.mxu0
        %v738 = vadd.f32 0.0, %v737
        %v739 = vpop.f32.mrf.mxu0
        %v740 = vadd.f32 0.0, %v739
        %741 = vmatmul.bf16.gmra.mxu0 %v441
        %v742 = vpop.f32.mrf.mxu0
        %v743 = vadd.f32 0.0, %v742
        %v744 = vpop.f32.mrf.mxu0
        %v745 = vadd.f32 0.0, %v744
        %746 = vmatmul.bf16.gmra.mxu0 %v444
        %v747 = vpop.f32.mrf.mxu0
        %v748 = vadd.f32 0.0, %v747
        %v749 = vpop.f32.mrf.mxu0
        %v750 = vadd.f32 0.0, %v749
        %751 = vmatmul.bf16.gmra.mxu0 %v447
        %v752 = vpop.f32.mrf.mxu0
        %v753 = vadd.f32 0.0, %v752
        %v754 = vpop.f32.mrf.mxu0
        %v755 = vadd.f32 0.0, %v754
        %756 = vmatmul.bf16.gmra.mxu0 %v450
        %v757 = vpop.f32.mrf.mxu0
        %v758 = vadd.f32 0.0, %v757
        %v759 = vpop.f32.mrf.mxu0
        %v760 = vadd.f32 0.0, %v759
        %761 = vmatmul.bf16.gmra.mxu0 %v453
        %v762 = vpop.f32.mrf.mxu0
        %v763 = vadd.f32 0.0, %v762
        %v764 = vpop.f32.mrf.mxu0
        %v765 = vadd.f32 0.0, %v764
        %766 = vmatmul.bf16.gmra.mxu0 %v456
        %v767 = vpop.f32.mrf.mxu0
        %v768 = vadd.f32 0.0, %v767
        %v769 = vpop.f32.mrf.mxu0
        %v770 = vadd.f32 0.0, %v769
        %771 = vdwg.mxu0
        %772 = vmatpush.bf16.msra.mxu0 %v657
        %773 = vmatpush.bf16.msra.mxu0 %v655
        %774 = vmatpush.bf16.msra.mxu0 %v653
        %775 = vmatpush.bf16.msra.mxu0 %v651
        %776 = vmatpush.bf16.msra.mxu0 %v649
        %777 = vmatpush.bf16.msra.mxu0 %v647
        %778 = vmatpush.bf16.msra.mxu0 %v645
        %779 = vmatpush.bf16.msra.mxu0 %v643
        %780 = vmatmul.bf16.gmra.mxu0 %v436
        %v781 = vpop.f32.mrf.mxu0
        %v782 = vadd.f32 %v733, %v781
        %v783 = vpop.f32.mrf.mxu0
        %v784 = vadd.f32 %v735, %v783
        %785 = vmatmul.bf16.gmra.mxu0 %v439
        %v786 = vpop.f32.mrf.mxu0
        %v787 = vadd.f32 %v738, %v786
        %v788 = vpop.f32.mrf.mxu0
        %v789 = vadd.f32 %v740, %v788
        %790 = vmatmul.bf16.gmra.mxu0 %v442
        %v791 = vpop.f32.mrf.mxu0
        %v792 = vadd.f32 %v743, %v791
        %v793 = vpop.f32.mrf.mxu0
        %v794 = vadd.f32 %v745, %v793
        %795 = vmatmul.bf16.gmra.mxu0 %v445
        %v796 = vpop.f32.mrf.mxu0
        %v797 = vadd.f32 %v748, %v796
        %v798 = vpop.f32.mrf.mxu0
        %v799 = vadd.f32 %v750, %v798
        %800 = vmatmul.bf16.gmra.mxu0 %v448
        %v801 = vpop.f32.mrf.mxu0
        %v802 = vadd.f32 %v753, %v801
        %v803 = vpop.f32.mrf.mxu0
        %v804 = vadd.f32 %v755, %v803
        %805 = vmatmul.bf16.gmra.mxu0 %v451
        %v806 = vpop.f32.mrf.mxu0
        %v807 = vadd.f32 %v758, %v806
        %v808 = vpop.f32.mrf.mxu0
        %v809 = vadd.f32 %v760, %v808
        %810 = vmatmul.bf16.gmra.mxu0 %v454
        %v811 = vpop.f32.mrf.mxu0
        %v812 = vadd.f32 %v763, %v811
        %v813 = vpop.f32.mrf.mxu0
        %v814 = vadd.f32 %v765, %v813
        %815 = vmatmul.bf16.gmra.mxu0 %v457
        %v816 = vpop.f32.mrf.mxu0
        %v817 = vadd.f32 %v768, %v816
        %v818 = vpop.f32.mrf.mxu0
        %v819 = vadd.f32 %v770, %v818
        %820 = vdwg.mxu0
        %821 = vmatpush.bf16.msra.mxu0 %v673
        %822 = vmatpush.bf16.msra.mxu0 %v671
        %823 = vmatpush.bf16.msra.mxu0 %v669
        %824 = vmatpush.bf16.msra.mxu0 %v667
        %825 = vmatpush.bf16.msra.mxu0 %v665
        %826 = vmatpush.bf16.msra.mxu0 %v663
        %827 = vmatpush.bf16.msra.mxu0 %v661
        %828 = vmatpush.bf16.msra.mxu0 %v659
        %829 = vmatmul.bf16.gmra.mxu0 %v437
        %v830 = vpop.f32.mrf.mxu0
        %v831 = vadd.f32 %v782, %v830
        %v832 = vpop.f32.mrf.mxu0
        %v833 = vadd.f32 %v784, %v832
        %834 = vmatmul.bf16.gmra.mxu0 %v440
        %v835 = vpop.f32.mrf.mxu0
        %v836 = vadd.f32 %v787, %v835
        %v837 = vpop.f32.mrf.mxu0
        %v838 = vadd.f32 %v789, %v837
        %839 = vmatmul.bf16.gmra.mxu0 %v443
        %v840 = vpop.f32.mrf.mxu0
        %v841 = vadd.f32 %v792, %v840
        %v842 = vpop.f32.mrf.mxu0
        %v843 = vadd.f32 %v794, %v842
        %844 = vmatmul.bf16.gmra.mxu0 %v446
        %v845 = vpop.f32.mrf.mxu0
        %v846 = vadd.f32 %v797, %v845
        %v847 = vpop.f32.mrf.mxu0
        %v848 = vadd.f32 %v799, %v847
        %849 = vmatmul.bf16.gmra.mxu0 %v449
        %v850 = vpop.f32.mrf.mxu0
        %v851 = vadd.f32 %v802, %v850
        %v852 = vpop.f32.mrf.mxu0
        %v853 = vadd.f32 %v804, %v852
        %854 = vmatmul.bf16.gmra.mxu0 %v452
        %v855 = vpop.f32.mrf.mxu0
        %v856 = vadd.f32 %v807, %v855
        %v857 = vpop.f32.mrf.mxu0
        %v858 = vadd.f32 %v809, %v857
        %859 = vmatmul.bf16.gmra.mxu0 %v455
        %v860 = vpop.f32.mrf.mxu0
        %v861 = vadd.f32 %v812, %v860
        %v862 = vpop.f32.mrf.mxu0
        %v863 = vadd.f32 %v814, %v862
        %864 = vmatmul.bf16.gmra.mxu0 %v458
        %v865 = vpop.f32.mrf.mxu0
        %v866 = vadd.f32 %v817, %v865
        %v867 = vpop.f32.mrf.mxu0
        %v868 = vadd.f32 %v819, %v867
        %869 = vdwg.mxu0
        %870 = vmatpush.bf16.msra.mxu0 %v642
        %871 = vmatpush.bf16.msra.mxu0 %v640
        %872 = vmatpush.bf16.msra.mxu0 %v638
        %873 = vmatpush.bf16.msra.mxu0 %v636
        %874 = vmatpush.bf16.msra.mxu0 %v634
        %875 = vmatpush.bf16.msra.mxu0 %v632
        %876 = vmatpush.bf16.msra.mxu0 %v630
        %877 = vmatpush.bf16.msra.mxu0 %v628
        %878 = vmatmul.bf16.gmra.mxu0 %v435
        %v879 = vpop.f32.mrf.mxu0
        %v880 = vadd.f32 0.0, %v879
        %v881 = vpop.f32.mrf.mxu0
        %v882 = vadd.f32 0.0, %v881
        %883 = vmatmul.bf16.gmra.mxu0 %v438
        %v884 = vpop.f32.mrf.mxu0
        %v885 = vadd.f32 0.0, %v884
        %v886 = vpop.f32.mrf.mxu0
        %v887 = vadd.f32 0.0, %v886
        %888 = vmatmul.bf16.gmra.mxu0 %v441
        %v889 = vpop.f32.mrf.mxu0
        %v890 = vadd.f32 0.0, %v889
        %v891 = vpop.f32.mrf.mxu0
        %v892 = vadd.f32 0.0, %v891
        %893 = vmatmul.bf16.gmra.mxu0 %v444
        %v894 = vpop.f32.mrf.mxu0
        %v895 = vadd.f32 0.0, %v894
        %v896 = vpop.f32.mrf.mxu0
        %v897 = vadd.f32 0.0, %v896
        %898 = vmatmul.bf16.gmra.mxu0 %v447
        %v899 = vpop.f32.mrf.mxu0
        %v900 = vadd.f32 0.0, %v899
        %v901 = vpop.f32.mrf.mxu0
        %v902 = vadd.f32 0.0, %v901
        %903 = vmatmul.bf16.gmra.mxu0 %v450
        %v904 = vpop.f32.mrf.mxu0
        %v905 = vadd.f32 0.0, %v904
        %v906 = vpop.f32.mrf.mxu0
        %v907 = vadd.f32 0.0, %v906
        %908 = vmatmul.bf16.gmra.mxu0 %v453
        %v909 = vpop.f32.mrf.mxu0
        %v910 = vadd.f32 0.0, %v909
        %v911 = vpop.f32.mrf.mxu0
        %v912 = vadd.f32 0.0, %v911
        %913 = vmatmul.bf16.gmra.mxu0 %v456
        %v914 = vpop.f32.mrf.mxu0
        %v915 = vadd.f32 0.0, %v914
        %v916 = vpop.f32.mrf.mxu0
        %v917 = vadd.f32 0.0, %v916
        %918 = vdwg.mxu0
        %919 = vmatpush.bf16.msra.mxu0 %v658
        %920 = vmatpush.bf16.msra.mxu0 %v656
        %921 = vmatpush.bf16.msra.mxu0 %v654
        %922 = vmatpush.bf16.msra.mxu0 %v652
        %923 = vmatpush.bf16.msra.mxu0 %v650
        %924 = vmatpush.bf16.msra.mxu0 %v648
        %925 = vmatpush.bf16.msra.mxu0 %v646
        %926 = vmatpush.bf16.msra.mxu0 %v644
        %927 = vmatmul.bf16.gmra.mxu0 %v436
        %v928 = vpop.f32.mrf.mxu0
        %v929 = vadd.f32 %v880, %v928
        %v930 = vpop.f32.mrf.mxu0
        %v931 = vadd.f32 %v882, %v930
        %932 = vmatmul.bf16.gmra.mxu0 %v439
        %v933 = vpop.f32.mrf.mxu0
        %v934 = vadd.f32 %v885, %v933
        %v935 = vpop.f32.mrf.mxu0
        %v936 = vadd.f32 %v887, %v935
        %937 = vmatmul.bf16.gmra.mxu0 %v442
        %v938 = vpop.f32.mrf.mxu0
        %v939 = vadd.f32 %v890, %v938
        %v940 = vpop.f32.mrf.mxu0
        %v941 = vadd.f32 %v892, %v940
        %942 = vmatmul.bf16.gmra.mxu0 %v445
        %v943 = vpop.f32.mrf.mxu0
        %v944 = vadd.f32 %v895, %v943
        %v945 = vpop.f32.mrf.mxu0
        %v946 = vadd.f32 %v897, %v945
        %947 = vmatmul.bf16.gmra.mxu0 %v448
        %v948 = vpop.f32.mrf.mxu0
        %v949 = vadd.f32 %v900, %v948
        %v950 = vpop.f32.mrf.mxu0
        %v951 = vadd.f32 %v902, %v950
        %952 = vmatmul.bf16.gmra.mxu0 %v451
        %v953 = vpop.f32.mrf.mxu0
        %v954 = vadd.f32 %v905, %v953
        %v955 = vpop.f32.mrf.mxu0
        %v956 = vadd.f32 %v907, %v955
        %957 = vmatmul.bf16.gmra.mxu0 %v454
        %v958 = vpop.f32.mrf.mxu0
        %v959 = vadd.f32 %v910, %v958
        %v960 = vpop.f32.mrf.mxu0
        %v961 = vadd.f32 %v912, %v960
        %962 = vmatmul.bf16.gmra.mxu0 %v457
        %v963 = vpop.f32.mrf.mxu0
        %v964 = vadd.f32 %v915, %v963
        %v965 = vpop.f32.mrf.mxu0
        %v966 = vadd.f32 %v917, %v965
        %967 = vdwg.mxu0
        %968 = vmatpush.bf16.msra.mxu0 %v674
        %969 = vmatpush.bf16.msra.mxu0 %v672
        %970 = vmatpush.bf16.msra.mxu0 %v670
        %971 = vmatpush.bf16.msra.mxu0 %v668
        %972 = vmatpush.bf16.msra.mxu0 %v666
        %973 = vmatpush.bf16.msra.mxu0 %v664
        %974 = vmatpush.bf16.msra.mxu0 %v662
        %975 = vmatpush.bf16.msra.mxu0 %v660
        %976 = vmatmul.bf16.gmra.mxu0 %v437
        %v977 = vpop.f32.mrf.mxu0
        %v978 = vadd.f32 %v929, %v977
        %v979 = vpop.f32.mrf.mxu0
        %v980 = vadd.f32 %v931, %v979
        %981 = vmatmul.bf16.gmra.mxu0 %v440
        %v982 = vpop.f32.mrf.mxu0
        %v983 = vadd.f32 %v934, %v982
        %v984 = vpop.f32.mrf.mxu0
        %v985 = vadd.f32 %v936, %v984
        %986 = vmatmul.bf16.gmra.mxu0 %v443
        %v987 = vpop.f32.mrf.mxu0
        %v988 = vadd.f32 %v939, %v987
        %v989 = vpop.f32.mrf.mxu0
        %v990 = vadd.f32 %v941, %v989
        %991 = vmatmul.bf16.gmra.mxu0 %v446
        %v992 = vpop.f32.mrf.mxu0
        %v993 = vadd.f32 %v944, %v992
        %v994 = vpop.f32.mrf.mxu0
        %v995 = vadd.f32 %v946, %v994
        %996 = vmatmul.bf16.gmra.mxu0 %v449
        %v997 = vpop.f32.mrf.mxu0
        %v998 = vadd.f32 %v949, %v997
        %v999 = vpop.f32.mrf.mxu0
        %v1000 = vadd.f32 %v951, %v999
        %1001 = vmatmul.bf16.gmra.mxu0 %v452
        %v1002 = vpop.f32.mrf.mxu0
        %v1003 = vadd.f32 %v954, %v1002
        %v1004 = vpop.f32.mrf.mxu0
        %v1005 = vadd.f32 %v956, %v1004
        %1006 = vmatmul.bf16.gmra.mxu0 %v455
        %v1007 = vpop.f32.mrf.mxu0
        %v1008 = vadd.f32 %v959, %v1007
        %v1009 = vpop.f32.mrf.mxu0
        %v1010 = vadd.f32 %v961, %v1009
        %1011 = vmatmul.bf16.gmra.mxu0 %v458
        %v1012 = vpop.f32.mrf.mxu0
        %v1013 = vadd.f32 %v964, %v1012
        %v1014 = vpop.f32.mrf.mxu0
        %v1015 = vadd.f32 %v966, %v1014
        %1016 = vdwg.mxu0
        %v1017 = vxor.u32 %v831, 2147483648
        %v1018 = vxor.u32 %v978, 2147483648
        %v1019 = vxor.u32 %v833, 2147483648
        %v1020 = vxor.u32 %v980, 2147483648
        %v1021 = vxor.u32 %v836, 2147483648
        %v1022 = vxor.u32 %v983, 2147483648
        %v1023 = vxor.u32 %v838, 2147483648
        %v1024 = vxor.u32 %v985, 2147483648
        %v1025 = vxor.u32 %v841, 2147483648
        %v1026 = vxor.u32 %v988, 2147483648
        %v1027 = vxor.u32 %v843, 2147483648
        %v1028 = vxor.u32 %v990, 2147483648
        %v1029 = vxor.u32 %v846, 2147483648
        %v1030 = vxor.u32 %v993, 2147483648
        %v1031 = vxor.u32 %v848, 2147483648
        %v1032 = vxor.u32 %v995, 2147483648
        %v1033 = vxor.u32 %v851, 2147483648
        %v1034 = vxor.u32 %v998, 2147483648
        %v1035 = vxor.u32 %v853, 2147483648
        %v1036 = vxor.u32 %v1000, 2147483648
        %v1037 = vxor.u32 %v856, 2147483648
        %v1038 = vxor.u32 %v1003, 2147483648
        %v1039 = vxor.u32 %v858, 2147483648
        %v1040 = vxor.u32 %v1005, 2147483648
        %v1041 = vmul.f32 %v1017, 1.442695
        %v1042 = vpow.pop %v1041
        %v1043 = vmul.f32 %v1018, 1.442695
        %v1044 = vpow.pop %v1043
        %v1045 = vmul.f32 %v1019, 1.442695
        %v1046 = vpow.pop %v1045
        %v1047 = vmul.f32 %v1020, 1.442695
        %v1048 = vpow.pop %v1047
        %v1049 = vmul.f32 %v1021, 1.442695
        %v1050 = vpow.pop %v1049
        %v1051 = vmul.f32 %v1022, 1.442695
        %v1052 = vpow.pop %v1051
        %v1053 = vmul.f32 %v1023, 1.442695
        %v1054 = vpow.pop %v1053
        %v1055 = vmul.f32 %v1024, 1.442695
        %v1056 = vpow.pop %v1055
        %v1057 = vmul.f32 %v1025, 1.442695
        %v1058 = vpow.pop %v1057
        %v1059 = vmul.f32 %v1026, 1.442695
        %v1060 = vpow.pop %v1059
        %v1061 = vmul.f32 %v1027, 1.442695
        %v1062 = vpow.pop %v1061
        %v1063 = vmul.f32 %v1028, 1.442695
        %v1064 = vpow.pop %v1063
        %v1065 = vmul.f32 %v1029, 1.442695
        %v1066 = vpow.pop %v1065
        %v1067 = vmul.f32 %v1030, 1.442695
        %v1068 = vpow.pop %v1067
        %v1069 = vmul.f32 %v1031, 1.442695
        %v1070 = vpow.pop %v1069
        %v1071 = vmul.f32 %v1032, 1.442695
        %v1072 = vpow.pop %v1071
        %v1073 = vmul.f32 %v1033, 1.442695
        %v1074 = vpow.pop %v1073
        %v1075 = vmul.f32 %v1034, 1.442695
        %v1076 = vpow.pop %v1075
        %v1077 = vmul.f32 %v1035, 1.442695
        %v1078 = vpow.pop %v1077
        %v1079 = vmul.f32 %v1036, 1.442695
        %v1080 = vpow.pop %v1079
        %v1081 = vmul.f32 %v1037, 1.442695
        %v1082 = vpow.pop %v1081
        %v1083 = vmul.f32 %v1038, 1.442695
        %v1084 = vpow.pop %v1083
        %v1085 = vmul.f32 %v1039, 1.442695
        %v1086 = vpow.pop %v1085
        %v1087 = vmul.f32 %v1040, 1.442695
        %v1088 = vpow.pop %v1087
        %v1089 = vadd.f32 %v1042, 1.0
        %v1090 = vadd.f32 %v1044, 1.0
        %v1091 = vadd.f32 %v1046, 1.0
        %v1092 = vadd.f32 %v1048, 1.0
        %v1093 = vadd.f32 %v1050, 1.0
        %v1094 = vadd.f32 %v1052, 1.0
        %v1095 = vadd.f32 %v1054, 1.0
        %v1096 = vadd.f32 %v1056, 1.0
        %v1097 = vadd.f32 %v1058, 1.0
        %v1098 = vadd.f32 %v1060, 1.0
        %v1099 = vadd.f32 %v1062, 1.0
        %v1100 = vadd.f32 %v1064, 1.0
        %v1101 = vadd.f32 %v1066, 1.0
        %v1102 = vadd.f32 %v1068, 1.0
        %v1103 = vadd.f32 %v1070, 1.0
        %v1104 = vadd.f32 %v1072, 1.0
        %v1105 = vadd.f32 %v1074, 1.0
        %v1106 = vadd.f32 %v1076, 1.0
        %v1107 = vadd.f32 %v1078, 1.0
        %v1108 = vadd.f32 %v1080, 1.0
        %v1109 = vadd.f32 %v1082, 1.0
        %v1110 = vadd.f32 %v1084, 1.0
        %v1111 = vadd.f32 %v1086, 1.0
        %v1112 = vadd.f32 %v1088, 1.0
        %v1113 = vrcp.pop %v1089
        %v1114 = vmul.f32 %v1089, %v1113
        %v1115 = vsub.f32 1.0, %v1114
        %v1116 = vmul.f32 %v1113, %v1115
        %v1117 = vadd.f32 %v1113, %v1116
        %vm1118 = vweird.f32 %v1089
        %vm1119 = vweird.f32 %v1113
        %vm1120 = vmor %vm1118, %vm1119
        %v1121 = vsel %vm1120, %v1113, %v1117
        %v1122 = vand.u32 2147483647, %v1089
        %vm1123 = vcmp.eq.f32.partialorder %v1122, 8.507059e+37
        %v1124 = vand.u32 %v1089, 2147483648
        %v1125 = vor.u32 1.1754944e-38, %v1124
        %v1126 = vsel %vm1123, %v1125, %v1121
        %v1127 = vmul.f32 1.0, %v1126
        %v1128 = vrcp.pop %v1090
        %v1129 = vmul.f32 %v1090, %v1128
        %v1130 = vsub.f32 1.0, %v1129
        %v1131 = vmul.f32 %v1128, %v1130
        %v1132 = vadd.f32 %v1128, %v1131
        %vm1133 = vweird.f32 %v1090
        %vm1134 = vweird.f32 %v1128
        %vm1135 = vmor %vm1133, %vm1134
        %v1136 = vsel %vm1135, %v1128, %v1132
        %v1137 = vand.u32 2147483647, %v1090
        %vm1138 = vcmp.eq.f32.partialorder %v1137, 8.507059e+37
        %v1139 = vand.u32 %v1090, 2147483648
        %v1140 = vor.u32 1.1754944e-38, %v1139
        %v1141 = vsel %vm1138, %v1140, %v1136
        %v1142 = vmul.f32 1.0, %v1141
        %v1143 = vrcp.pop %v1091
        %v1144 = vmul.f32 %v1091, %v1143
        %v1145 = vsub.f32 1.0, %v1144
        %v1146 = vmul.f32 %v1143, %v1145
        %v1147 = vadd.f32 %v1143, %v1146
        %vm1148 = vweird.f32 %v1091
        %vm1149 = vweird.f32 %v1143
        %vm1150 = vmor %vm1148, %vm1149
        %v1151 = vsel %vm1150, %v1143, %v1147
        %v1152 = vand.u32 2147483647, %v1091
        %vm1153 = vcmp.eq.f32.partialorder %v1152, 8.507059e+37
        %v1154 = vand.u32 %v1091, 2147483648
        %v1155 = vor.u32 1.1754944e-38, %v1154
        %v1156 = vsel %vm1153, %v1155, %v1151
        %v1157 = vmul.f32 1.0, %v1156
        %v1158 = vrcp.pop %v1092
        %v1159 = vmul.f32 %v1092, %v1158
        %v1160 = vsub.f32 1.0, %v1159
        %v1161 = vmul.f32 %v1158, %v1160
        %v1162 = vadd.f32 %v1158, %v1161
        %vm1163 = vweird.f32 %v1092
        %vm1164 = vweird.f32 %v1158
        %vm1165 = vmor %vm1163, %vm1164
        %v1166 = vsel %vm1165, %v1158, %v1162
        %v1167 = vand.u32 2147483647, %v1092
        %vm1168 = vcmp.eq.f32.partialorder %v1167, 8.507059e+37
        %v1169 = vand.u32 %v1092, 2147483648
        %v1170 = vor.u32 1.1754944e-38, %v1169
        %v1171 = vsel %vm1168, %v1170, %v1166
        %v1172 = vmul.f32 1.0, %v1171
        %v1173 = vrcp.pop %v1093
        %v1174 = vmul.f32 %v1093, %v1173
        %v1175 = vsub.f32 1.0, %v1174
        %v1176 = vmul.f32 %v1173, %v1175
        %v1177 = vadd.f32 %v1173, %v1176
        %vm1178 = vweird.f32 %v1093
        %vm1179 = vweird.f32 %v1173
        %vm1180 = vmor %vm1178, %vm1179
        %v1181 = vsel %vm1180, %v1173, %v1177
        %v1182 = vand.u32 2147483647, %v1093
        %vm1183 = vcmp.eq.f32.partialorder %v1182, 8.507059e+37
        %v1184 = vand.u32 %v1093, 2147483648
        %v1185 = vor.u32 1.1754944e-38, %v1184
        %v1186 = vsel %vm1183, %v1185, %v1181
        %v1187 = vmul.f32 1.0, %v1186
        %v1188 = vrcp.pop %v1094
        %v1189 = vmul.f32 %v1094, %v1188
        %v1190 = vsub.f32 1.0, %v1189
        %v1191 = vmul.f32 %v1188, %v1190
        %v1192 = vadd.f32 %v1188, %v1191
        %vm1193 = vweird.f32 %v1094
        %vm1194 = vweird.f32 %v1188
        %vm1195 = vmor %vm1193, %vm1194
        %v1196 = vsel %vm1195, %v1188, %v1192
        %v1197 = vand.u32 2147483647, %v1094
        %vm1198 = vcmp.eq.f32.partialorder %v1197, 8.507059e+37
        %v1199 = vand.u32 %v1094, 2147483648
        %v1200 = vor.u32 1.1754944e-38, %v1199
        %v1201 = vsel %vm1198, %v1200, %v1196
        %v1202 = vmul.f32 1.0, %v1201
        %v1203 = vrcp.pop %v1095
        %v1204 = vmul.f32 %v1095, %v1203
        %v1205 = vsub.f32 1.0, %v1204
        %v1206 = vmul.f32 %v1203, %v1205
        %v1207 = vadd.f32 %v1203, %v1206
        %vm1208 = vweird.f32 %v1095
        %vm1209 = vweird.f32 %v1203
        %vm1210 = vmor %vm1208, %vm1209
        %v1211 = vsel %vm1210, %v1203, %v1207
        %v1212 = vand.u32 2147483647, %v1095
        %vm1213 = vcmp.eq.f32.partialorder %v1212, 8.507059e+37
        %v1214 = vand.u32 %v1095, 2147483648
        %v1215 = vor.u32 1.1754944e-38, %v1214
        %v1216 = vsel %vm1213, %v1215, %v1211
        %v1217 = vmul.f32 1.0, %v1216
        %v1218 = vrcp.pop %v1096
        %v1219 = vmul.f32 %v1096, %v1218
        %v1220 = vsub.f32 1.0, %v1219
        %v1221 = vmul.f32 %v1218, %v1220
        %v1222 = vadd.f32 %v1218, %v1221
        %vm1223 = vweird.f32 %v1096
        %vm1224 = vweird.f32 %v1218
        %vm1225 = vmor %vm1223, %vm1224
        %v1226 = vsel %vm1225, %v1218, %v1222
        %v1227 = vand.u32 2147483647, %v1096
        %vm1228 = vcmp.eq.f32.partialorder %v1227, 8.507059e+37
        %v1229 = vand.u32 %v1096, 2147483648
        %v1230 = vor.u32 1.1754944e-38, %v1229
        %v1231 = vsel %vm1228, %v1230, %v1226
        %v1232 = vmul.f32 1.0, %v1231
        %v1233 = vrcp.pop %v1097
        %v1234 = vmul.f32 %v1097, %v1233
        %v1235 = vsub.f32 1.0, %v1234
        %v1236 = vmul.f32 %v1233, %v1235
        %v1237 = vadd.f32 %v1233, %v1236
        %vm1238 = vweird.f32 %v1097
        %vm1239 = vweird.f32 %v1233
        %vm1240 = vmor %vm1238, %vm1239
        %v1241 = vsel %vm1240, %v1233, %v1237
        %v1242 = vand.u32 2147483647, %v1097
        %vm1243 = vcmp.eq.f32.partialorder %v1242, 8.507059e+37
        %v1244 = vand.u32 %v1097, 2147483648
        %v1245 = vor.u32 1.1754944e-38, %v1244
        %v1246 = vsel %vm1243, %v1245, %v1241
        %v1247 = vmul.f32 1.0, %v1246
        %v1248 = vrcp.pop %v1098
        %v1249 = vmul.f32 %v1098, %v1248
        %v1250 = vsub.f32 1.0, %v1249
        %v1251 = vmul.f32 %v1248, %v1250
        %v1252 = vadd.f32 %v1248, %v1251
        %vm1253 = vweird.f32 %v1098
        %vm1254 = vweird.f32 %v1248
        %vm1255 = vmor %vm1253, %vm1254
        %v1256 = vsel %vm1255, %v1248, %v1252
        %v1257 = vand.u32 2147483647, %v1098
        %vm1258 = vcmp.eq.f32.partialorder %v1257, 8.507059e+37
        %v1259 = vand.u32 %v1098, 2147483648
        %v1260 = vor.u32 1.1754944e-38, %v1259
        %v1261 = vsel %vm1258, %v1260, %v1256
        %v1262 = vmul.f32 1.0, %v1261
        %v1263 = vrcp.pop %v1099
        %v1264 = vmul.f32 %v1099, %v1263
        %v1265 = vsub.f32 1.0, %v1264
        %v1266 = vmul.f32 %v1263, %v1265
        %v1267 = vadd.f32 %v1263, %v1266
        %vm1268 = vweird.f32 %v1099
        %vm1269 = vweird.f32 %v1263
        %vm1270 = vmor %vm1268, %vm1269
        %v1271 = vsel %vm1270, %v1263, %v1267
        %v1272 = vand.u32 2147483647, %v1099
        %vm1273 = vcmp.eq.f32.partialorder %v1272, 8.507059e+37
        %v1274 = vand.u32 %v1099, 2147483648
        %v1275 = vor.u32 1.1754944e-38, %v1274
        %v1276 = vsel %vm1273, %v1275, %v1271
        %v1277 = vmul.f32 1.0, %v1276
        %v1278 = vrcp.pop %v1100
        %v1279 = vmul.f32 %v1100, %v1278
        %v1280 = vsub.f32 1.0, %v1279
        %v1281 = vmul.f32 %v1278, %v1280
        %v1282 = vadd.f32 %v1278, %v1281
        %vm1283 = vweird.f32 %v1100
        %vm1284 = vweird.f32 %v1278
        %vm1285 = vmor %vm1283, %vm1284
        %v1286 = vsel %vm1285, %v1278, %v1282
        %v1287 = vand.u32 2147483647, %v1100
        %vm1288 = vcmp.eq.f32.partialorder %v1287, 8.507059e+37
        %v1289 = vand.u32 %v1100, 2147483648
        %v1290 = vor.u32 1.1754944e-38, %v1289
        %v1291 = vsel %vm1288, %v1290, %v1286
        %v1292 = vmul.f32 1.0, %v1291
        %v1293 = vrcp.pop %v1101
        %v1294 = vmul.f32 %v1101, %v1293
        %v1295 = vsub.f32 1.0, %v1294
        %v1296 = vmul.f32 %v1293, %v1295
        %v1297 = vadd.f32 %v1293, %v1296
        %vm1298 = vweird.f32 %v1101
        %vm1299 = vweird.f32 %v1293
        %vm1300 = vmor %vm1298, %vm1299
        %v1301 = vsel %vm1300, %v1293, %v1297
        %v1302 = vand.u32 2147483647, %v1101
        %vm1303 = vcmp.eq.f32.partialorder %v1302, 8.507059e+37
        %v1304 = vand.u32 %v1101, 2147483648
        %v1305 = vor.u32 1.1754944e-38, %v1304
        %v1306 = vsel %vm1303, %v1305, %v1301
        %v1307 = vmul.f32 1.0, %v1306
        %v1308 = vrcp.pop %v1102
        %v1309 = vmul.f32 %v1102, %v1308
        %v1310 = vsub.f32 1.0, %v1309
        %v1311 = vmul.f32 %v1308, %v1310
        %v1312 = vadd.f32 %v1308, %v1311
        %vm1313 = vweird.f32 %v1102
        %vm1314 = vweird.f32 %v1308
        %vm1315 = vmor %vm1313, %vm1314
        %v1316 = vsel %vm1315, %v1308, %v1312
        %v1317 = vand.u32 2147483647, %v1102
        %vm1318 = vcmp.eq.f32.partialorder %v1317, 8.507059e+37
        %v1319 = vand.u32 %v1102, 2147483648
        %v1320 = vor.u32 1.1754944e-38, %v1319
        %v1321 = vsel %vm1318, %v1320, %v1316
        %v1322 = vmul.f32 1.0, %v1321
        %v1323 = vrcp.pop %v1103
        %v1324 = vmul.f32 %v1103, %v1323
        %v1325 = vsub.f32 1.0, %v1324
        %v1326 = vmul.f32 %v1323, %v1325
        %v1327 = vadd.f32 %v1323, %v1326
        %vm1328 = vweird.f32 %v1103
        %vm1329 = vweird.f32 %v1323
        %vm1330 = vmor %vm1328, %vm1329
        %v1331 = vsel %vm1330, %v1323, %v1327
        %v1332 = vand.u32 2147483647, %v1103
        %vm1333 = vcmp.eq.f32.partialorder %v1332, 8.507059e+37
        %v1334 = vand.u32 %v1103, 2147483648
        %v1335 = vor.u32 1.1754944e-38, %v1334
        %v1336 = vsel %vm1333, %v1335, %v1331
        %v1337 = vmul.f32 1.0, %v1336
        %v1338 = vrcp.pop %v1104
        %v1339 = vmul.f32 %v1104, %v1338
        %v1340 = vsub.f32 1.0, %v1339
        %v1341 = vmul.f32 %v1338, %v1340
        %v1342 = vadd.f32 %v1338, %v1341
        %vm1343 = vweird.f32 %v1104
        %vm1344 = vweird.f32 %v1338
        %vm1345 = vmor %vm1343, %vm1344
        %v1346 = vsel %vm1345, %v1338, %v1342
        %v1347 = vand.u32 2147483647, %v1104
        %vm1348 = vcmp.eq.f32.partialorder %v1347, 8.507059e+37
        %v1349 = vand.u32 %v1104, 2147483648
        %v1350 = vor.u32 1.1754944e-38, %v1349
        %v1351 = vsel %vm1348, %v1350, %v1346
        %v1352 = vmul.f32 1.0, %v1351
        %v1353 = vrcp.pop %v1105
        %v1354 = vmul.f32 %v1105, %v1353
        %v1355 = vsub.f32 1.0, %v1354
        %v1356 = vmul.f32 %v1353, %v1355
        %v1357 = vadd.f32 %v1353, %v1356
        %vm1358 = vweird.f32 %v1105
        %vm1359 = vweird.f32 %v1353
        %vm1360 = vmor %vm1358, %vm1359
        %v1361 = vsel %vm1360, %v1353, %v1357
        %v1362 = vand.u32 2147483647, %v1105
        %vm1363 = vcmp.eq.f32.partialorder %v1362, 8.507059e+37
        %v1364 = vand.u32 %v1105, 2147483648
        %v1365 = vor.u32 1.1754944e-38, %v1364
        %v1366 = vsel %vm1363, %v1365, %v1361
        %v1367 = vmul.f32 1.0, %v1366
        %v1368 = vrcp.pop %v1106
        %v1369 = vmul.f32 %v1106, %v1368
        %v1370 = vsub.f32 1.0, %v1369
        %v1371 = vmul.f32 %v1368, %v1370
        %v1372 = vadd.f32 %v1368, %v1371
        %vm1373 = vweird.f32 %v1106
        %vm1374 = vweird.f32 %v1368
        %vm1375 = vmor %vm1373, %vm1374
        %v1376 = vsel %vm1375, %v1368, %v1372
        %v1377 = vand.u32 2147483647, %v1106
        %vm1378 = vcmp.eq.f32.partialorder %v1377, 8.507059e+37
        %v1379 = vand.u32 %v1106, 2147483648
        %v1380 = vor.u32 1.1754944e-38, %v1379
        %v1381 = vsel %vm1378, %v1380, %v1376
        %v1382 = vmul.f32 1.0, %v1381
        %v1383 = vrcp.pop %v1107
        %v1384 = vmul.f32 %v1107, %v1383
        %v1385 = vsub.f32 1.0, %v1384
        %v1386 = vmul.f32 %v1383, %v1385
        %v1387 = vadd.f32 %v1383, %v1386
        %vm1388 = vweird.f32 %v1107
        %vm1389 = vweird.f32 %v1383
        %vm1390 = vmor %vm1388, %vm1389
        %v1391 = vsel %vm1390, %v1383, %v1387
        %v1392 = vand.u32 2147483647, %v1107
        %vm1393 = vcmp.eq.f32.partialorder %v1392, 8.507059e+37
        %v1394 = vand.u32 %v1107, 2147483648
        %v1395 = vor.u32 1.1754944e-38, %v1394
        %v1396 = vsel %vm1393, %v1395, %v1391
        %v1397 = vmul.f32 1.0, %v1396
        %v1398 = vrcp.pop %v1108
        %v1399 = vmul.f32 %v1108, %v1398
        %v1400 = vsub.f32 1.0, %v1399
        %v1401 = vmul.f32 %v1398, %v1400
        %v1402 = vadd.f32 %v1398, %v1401
        %vm1403 = vweird.f32 %v1108
        %vm1404 = vweird.f32 %v1398
        %vm1405 = vmor %vm1403, %vm1404
        %v1406 = vsel %vm1405, %v1398, %v1402
        %v1407 = vand.u32 2147483647, %v1108
        %vm1408 = vcmp.eq.f32.partialorder %v1407, 8.507059e+37
        %v1409 = vand.u32 %v1108, 2147483648
        %v1410 = vor.u32 1.1754944e-38, %v1409
        %v1411 = vsel %vm1408, %v1410, %v1406
        %v1412 = vmul.f32 1.0, %v1411
        %v1413 = vrcp.pop %v1109
        %v1414 = vmul.f32 %v1109, %v1413
        %v1415 = vsub.f32 1.0, %v1414
        %v1416 = vmul.f32 %v1413, %v1415
        %v1417 = vadd.f32 %v1413, %v1416
        %vm1418 = vweird.f32 %v1109
        %vm1419 = vweird.f32 %v1413
        %vm1420 = vmor %vm1418, %vm1419
        %v1421 = vsel %vm1420, %v1413, %v1417
        %v1422 = vand.u32 2147483647, %v1109
        %vm1423 = vcmp.eq.f32.partialorder %v1422, 8.507059e+37
        %v1424 = vand.u32 %v1109, 2147483648
        %v1425 = vor.u32 1.1754944e-38, %v1424
        %v1426 = vsel %vm1423, %v1425, %v1421
        %v1427 = vmul.f32 1.0, %v1426
        %v1428 = vrcp.pop %v1110
        %v1429 = vmul.f32 %v1110, %v1428
        %v1430 = vsub.f32 1.0, %v1429
        %v1431 = vmul.f32 %v1428, %v1430
        %v1432 = vadd.f32 %v1428, %v1431
        %vm1433 = vweird.f32 %v1110
        %vm1434 = vweird.f32 %v1428
        %vm1435 = vmor %vm1433, %vm1434
        %v1436 = vsel %vm1435, %v1428, %v1432
        %v1437 = vand.u32 2147483647, %v1110
        %vm1438 = vcmp.eq.f32.partialorder %v1437, 8.507059e+37
        %v1439 = vand.u32 %v1110, 2147483648
        %v1440 = vor.u32 1.1754944e-38, %v1439
        %v1441 = vsel %vm1438, %v1440, %v1436
        %v1442 = vmul.f32 1.0, %v1441
        %v1443 = vrcp.pop %v1111
        %v1444 = vmul.f32 %v1111, %v1443
        %v1445 = vsub.f32 1.0, %v1444
        %v1446 = vmul.f32 %v1443, %v1445
        %v1447 = vadd.f32 %v1443, %v1446
        %vm1448 = vweird.f32 %v1111
        %vm1449 = vweird.f32 %v1443
        %vm1450 = vmor %vm1448, %vm1449
        %v1451 = vsel %vm1450, %v1443, %v1447
        %v1452 = vand.u32 2147483647, %v1111
        %vm1453 = vcmp.eq.f32.partialorder %v1452, 8.507059e+37
        %v1454 = vand.u32 %v1111, 2147483648
        %v1455 = vor.u32 1.1754944e-38, %v1454
        %v1456 = vsel %vm1453, %v1455, %v1451
        %v1457 = vmul.f32 1.0, %v1456
        %v1458 = vrcp.pop %v1112
        %v1459 = vmul.f32 %v1112, %v1458
        %v1460 = vsub.f32 1.0, %v1459
        %v1461 = vmul.f32 %v1458, %v1460
        %v1462 = vadd.f32 %v1458, %v1461
        %vm1463 = vweird.f32 %v1112
        %vm1464 = vweird.f32 %v1458
        %vm1465 = vmor %vm1463, %vm1464
        %v1466 = vsel %vm1465, %v1458, %v1462
        %v1467 = vand.u32 2147483647, %v1112
        %vm1468 = vcmp.eq.f32.partialorder %v1467, 8.507059e+37
        %v1469 = vand.u32 %v1112, 2147483648
        %v1470 = vor.u32 1.1754944e-38, %v1469
        %v1471 = vsel %vm1468, %v1470, %v1466
        %v1472 = vmul.f32 1.0, %v1471
        %v1473 = vtanh.pop %v861
        %v1474 = vtanh.pop %v1008
        %v1475 = vtanh.pop %v863
        %v1476 = vtanh.pop %v1010
        %v1477 = vtanh.pop %v866
        %v1478 = vtanh.pop %v1013
        %v1479 = vtanh.pop %v868
        %v1480 = vtanh.pop %v1015
        %v1481 = vld [vmem:[%s235] sm:$0xff]
        %v1482 = vld [vmem:[%s235 + $0x8] sm:$0xff]
        %v1483 = vld [vmem:[%s235 + $0x10] sm:$0xff]
        %v1484 = vld [vmem:[%s235 + $0x18] sm:$0xff]
        %v1485 = vld [vmem:[%s235 + $0x20] sm:$0xff]
        %v1486 = vld [vmem:[%s235 + $0x28] sm:$0xff]
        %v1487 = vld [vmem:[%s235 + $0x30] sm:$0xff]
        %v1488 = vld [vmem:[%s235 + $0x38] sm:$0xff]
        %v1489 = vmul.f32 %v1247, %v1481
        %v1490 = vmul.f32 %v1262, %v1482
        %v1491 = vmul.f32 %v1277, %v1483
        %v1492 = vmul.f32 %v1292, %v1484
        %v1493 = vmul.f32 %v1307, %v1485
        %v1494 = vmul.f32 %v1322, %v1486
        %v1495 = vmul.f32 %v1337, %v1487
        %v1496 = vmul.f32 %v1352, %v1488
        %v1497 = vmul.f32 %v1127, %v1473
        %v1498 = vmul.f32 %v1142, %v1474
        %v1499 = vmul.f32 %v1157, %v1475
        %v1500 = vmul.f32 %v1172, %v1476
        %v1501 = vmul.f32 %v1187, %v1477
        %v1502 = vmul.f32 %v1202, %v1478
        %v1503 = vmul.f32 %v1217, %v1479
        %v1504 = vmul.f32 %v1232, %v1480
        %v1505 = vadd.f32 %v1489, %v1497
        %v1506 = vadd.f32 %v1490, %v1498
        %v1507 = vadd.f32 %v1491, %v1499
        %v1508 = vadd.f32 %v1492, %v1500
        %v1509 = vadd.f32 %v1493, %v1501
        %v1510 = vadd.f32 %v1494, %v1502
        %v1511 = vadd.f32 %v1495, %v1503
        %v1512 = vadd.f32 %v1496, %v1504
        %v1513 = vtanh.pop %v1505
        %v1514 = vtanh.pop %v1506
        %v1515 = vtanh.pop %v1507
        %v1516 = vtanh.pop %v1508
        %v1517 = vtanh.pop %v1509
        %v1518 = vtanh.pop %v1510
        %v1519 = vtanh.pop %v1511
        %v1520 = vtanh.pop %v1512
        %v1521 = vmul.f32 %v1367, %v1513
        %v1522 = vmul.f32 %v1382, %v1514
        %v1523 = vmul.f32 %v1397, %v1515
        %v1524 = vmul.f32 %v1412, %v1516
        %v1525 = vmul.f32 %v1427, %v1517
        %v1526 = vmul.f32 %v1442, %v1518
        %v1527 = vmul.f32 %v1457, %v1519
        %v1528 = vmul.f32 %v1472, %v1520
        %1529 = vst [vmem:[%s263] sm:$0xff] %v1521
        %1530 = vst [vmem:[%s263 + $0x8] sm:$0xff] %v1522
        %1531 = vst [vmem:[%s263 + $0x10] sm:$0xff] %v1523
        %1532 = vst [vmem:[%s263 + $0x18] sm:$0xff] %v1524
        %1533 = vst [vmem:[%s263 + $0x20] sm:$0xff] %v1525
        %1534 = vst [vmem:[%s263 + $0x28] sm:$0xff] %v1526
        %1535 = vst [vmem:[%s263 + $0x30] sm:$0xff] %v1527
        %1536 = vst [vmem:[%s263 + $0x38] sm:$0xff] %v1528
        %1537 = vst [vmem:[%s270] sm:$0xff] %v1505
        %1538 = vst [vmem:[%s270 + $0x8] sm:$0xff] %v1506
        %1539 = vst [vmem:[%s270 + $0x10] sm:$0xff] %v1507
        %1540 = vst [vmem:[%s270 + $0x18] sm:$0xff] %v1508
        %1541 = vst [vmem:[%s270 + $0x20] sm:$0xff] %v1509
        %1542 = vst [vmem:[%s270 + $0x28] sm:$0xff] %v1510
        %1543 = vst [vmem:[%s270 + $0x30] sm:$0xff] %v1511
        %1544 = vst [vmem:[%s270 + $0x38] sm:$0xff] %v1512
        %s1545 = sand.u32 %s109, 1
        %s1546 = scalar_lea.sflag [#allocation4], %s1545
        %s1547 = sand.u32 %s109, 1
        %s1548 = smul.addr %s1547, 64
        %s1549 = scalar_lea.vmem [#allocation7], %s1548
        %s1550 = sand.u32 %s135, 1
        %s1551 = scalar_lea.sflag [#allocation9], %s1550
        %s1552 = sand.u32 %s135, 1
        %s1553 = smul.addr %s1552, 64
        %s1554 = scalar_lea.vmem [#allocation8], %s1553
        // Predicated region
        $region41: #{tpu_custom_call.1} parent=31 // pred_check
          %p1555 = pneg %p119
        $region42: #{tpu_custom_call.1} parent=31 // pred_check_branch
          %1557 = sbr.rel (%p1555) target = $region44
        $region43: #{tpu_custom_call.1} parent=31 // pred_region
          %s1558 = smul.u32 2, %s28
          %1560 = vsyncadd %s1546, 0
          %s1561 = smul.addr %s1558, 8
          %s1562 = scalar_lea.hbm %s3, %s1561
          %s1563 = sshll.u32 %s1549, 4
          %s1564 = int_to_ptr.vmem [resolvable:$true] %s1563
          %s1565 = sshll.u32 %s1562, 4
          %s1566 = int_to_ptr.hbm [resolvable:$true] %s1565
          %1571 = dma.vmem_to_hbm [thread:$0]  %s1564, 1024, %s1566, %s1546, 256, 512, 16
        $region44: #{tpu_custom_call.1} parent=31 // pred_fallthru
          _
        // Predicated region
        $region45: #{tpu_custom_call.1} parent=31 // pred_check
          %p1572 = pneg %p145
        $region46: #{tpu_custom_call.1} parent=31 // pred_check_branch
          %1574 = sbr.rel (%p1572) target = $region48
        $region47: #{tpu_custom_call.1} parent=31 // pred_region
          %s1575 = smul.u32 2, %s28
          %1577 = vsyncadd %s1551, 0
          %s1578 = smul.addr %s1575, 8
          %s1579 = scalar_lea.hbm %s4, %s1578
          %s1580 = sshll.u32 %s1554, 4
          %s1581 = int_to_ptr.vmem [resolvable:$true] %s1580
          %s1582 = sshll.u32 %s1579, 4
          %s1583 = int_to_ptr.hbm [resolvable:$true] %s1582
          %1588 = dma.vmem_to_hbm [thread:$0]  %s1581, 1024, %s1583, %s1551, 256, 512, 16
        $region48: #{tpu_custom_call.1} parent=31 // pred_fallthru
          _
      $region32: #{tpu_custom_call.1} parent=5 // pred_fallthru
        _
      %p1589 = scmp.le.s32.totalorder 2, %s23
      // Predicated region
      $region49: #{tpu_custom_call.1} parent=5 // pred_check
        %p1590 = pneg %p1589
      $region50: #{tpu_custom_call.1} parent=5 // pred_check_branch
        %1592 = sbr.rel (%p1590) target = $region52
      $region51: #{tpu_custom_call.1} parent=5 // pred_region
        %s1593 = ssub.s32 %s23, 2
        // Predicated region
        $region53: #{tpu_custom_call.1} parent=51 // pred_check
          %p1594 = pneg %p125
        $region54: #{tpu_custom_call.1} parent=51 // pred_check_branch
          %1596 = sbr.rel (%p1594) target = $region56
        $region55: #{tpu_custom_call.1} parent=51 // pred_region
          %s1597 = sand.u32 %s110, 1
          %s1598 = scalar_lea.sflag [#allocation4], %s1597
          %s1599 = sand.u32 %s110, 1
          %s1600 = smul.addr %s1599, 64
          %s1601 = scalar_lea.vmem [#allocation7], %s1600
          %1603 = dma.done %s1598, 1024
        $region56: #{tpu_custom_call.1} parent=51 // pred_fallthru
          _
        // Predicated region
        $region57: #{tpu_custom_call.1} parent=51 // pred_check
          %p1604 = pneg %p151
        $region58: #{tpu_custom_call.1} parent=51 // pred_check_branch
          %1606 = sbr.rel (%p1604) target = $region60
        $region59: #{tpu_custom_call.1} parent=51 // pred_region
          %s1607 = sand.u32 %s136, 1
          %s1608 = scalar_lea.sflag [#allocation9], %s1607
          %s1609 = sand.u32 %s136, 1
          %s1610 = smul.addr %s1609, 64
          %s1611 = scalar_lea.vmem [#allocation8], %s1610
          %1613 = dma.done %s1608, 1024
        $region60: #{tpu_custom_call.1} parent=51 // pred_fallthru
          _
      $region52: #{tpu_custom_call.1} parent=5 // pred_fallthru
        _
    $region6: #{tpu_custom_call.1} parent=1 // loop_footer
      %s27 = sadd.s32 1, %s23
    $region7: #{tpu_custom_call.1} parent=1 // loop_footer_branch
      %22 = sbr.rel target = $region3
    $region8: #{tpu_custom_call.1} parent=1 // loop_exit
      _
    %1614 = vsyncpa [#allocation3], 1
    %s1615 = scalar_lea.sflag [#allocation3], 1
    %1616 = vsyncpa %s1615, 1
    %1617 = vsyncpa [#allocation6], 1
    %s1618 = scalar_lea.sflag [#allocation6], 1
    %1619 = vsyncpa %s1618, 1
    %1620 = vsyncpa [#allocation4], 1
    %s1621 = scalar_lea.sflag [#allocation4], 1
    %1622 = vsyncpa %s1621, 1
    %1623 = vsyncpa [#allocation9], 1
    %s1624 = scalar_lea.sflag [#allocation9], 1
    %1625 = vsyncpa %s1624, 1

</llo_original>
